<compile_context>
chip_gen: v5e
topology: v5e:2x2
jax: 0.10.0
libtpu: 0.0.40
codegen_flags: <defaults>
</compile_context>

<pallas_src>
import functools

import jax
import jax.numpy as jnp
import numpy as np
from jax.experimental import pallas as pl
from jax.experimental.pallas import tpu as pltpu


# ----------------------------------------------------------------------------
# Fused kernel: runs the entire 3-block forward for B images per grid step.
#   x_ref : (M=B*H, WC)            flattened activation slab (lane-dense)
#   w_ref : (n_conv, ks*WC, WC)    K-folded banded weights (VMEM resident)
#   b_ref : (n_conv, 1, WC)        fused biases (f32)
#   o_ref : (M, WC)                output, full 128-lane unmasked stores
# ----------------------------------------------------------------------------
def _fused_kernel(x_ref, w_ref, b_ref, o_ref, *, ks, H, p, n_blocks, M, WC,
                  compute_dtype):
    # Per-image H-boundary masks (True where the rolled tap row must be zero).
    # Computed once, reused by all 6 convs.  They also cover the rows that
    # pltpu.roll wraps around the slab / across image boundaries.
    row_in_img = jax.lax.broadcasted_iota(jnp.int32, (M, WC), 0) % H
    masks = {}
    for dy in range(ks):
        if dy < p:
            masks[dy] = row_in_img < (p - dy)
        elif dy > p:
            masks[dy] = row_in_img >= (H - (dy - p))

    def taps_of(a):
        # a: (M, WC) f32 -> ks shifted/masked operands in compute_dtype.
        # shifted_dy[i] = a[i + dy - p]  (zero outside the image in H).
        out = []
        for dy in range(ks):
            if dy == p:
                t = a
            else:
                t = pltpu.roll(a, (p - dy) % M, axis=0)   # XLU rotate
                t = jnp.where(masks[dy], 0.0, t)
            out.append(t.astype(compute_dtype))
        return out

    def conv(a, idx, relu):
        taps = taps_of(a)
        k_op = taps[0] if ks == 1 else jnp.concatenate(taps, axis=1)  # (M,ks*WC)
        acc = jnp.dot(k_op, w_ref[idx],                               # 1 MXU dot
                      preferred_element_type=jnp.float32)
        acc = acc + b_ref[idx]                 # (1, WC) broadcasts over rows
        if relu:
            acc = jnp.maximum(acc, 0.0)
        return acc

    x0 = x_ref[...].astype(jnp.float32)
    h = x0
    for blk in range(n_blocks):
        t = conv(h, 2 * blk, relu=True)              # conv1 + ReLU
        h = h + conv(t, 2 * blk + 1, relu=False)     # conv2 + block residual
    o_ref[...] = (x0 + h).astype(o_ref.dtype)        # outer residual


# ----------------------------------------------------------------------------
# Weight transform (run ONCE at model-build time, outside the jitted forward).
# For each dy builds a (W*Cin, W*Cout) banded matrix with the dx taps and the
# W-boundary zero padding baked in, then stacks the ks bands along K:
#   sum_dy shifted_dy @ band_dy  ==  SAME conv   (H padding via roll+mask).
# ----------------------------------------------------------------------------
def _fuse_conv_weight(w, W):
    ks, _, Cin, Cout = w.shape
    p = ks // 2
    wi = jnp.arange(W)[:, None]
    wo = jnp.arange(W)[None, :]
    dx = wi - wo + p                                        # (W, W)
    valid = (dx >= 0) & (dx < ks)
    g = w[:, jnp.clip(dx, 0, ks - 1)]                       # (ks, W, W, Cin, Cout)
    g = jnp.where(valid[None, :, :, None, None], g, 0.0)
    g = jnp.transpose(g, (0, 1, 3, 2, 4))                   # (ks, W, Cin, W, Cout)
    return g.reshape(ks * W * Cin, W * Cout)                # K-folded


def prepare_params(all_params, W, compute_dtype=jnp.bfloat16):
    """Fuse conv weights/biases once.  all_params: list of (w1,b1,w2,b2) HWIO."""
    ws, bs = [], []
    for (w1, b1, w2, b2) in all_params:
        for wk, bk in ((w1, b1), (w2, b2)):
            ws.append(_fuse_conv_weight(wk.astype(jnp.float32), W)
                      .astype(compute_dtype))
            bs.append(jnp.tile(bk.astype(jnp.float32), W))
    w_fused = jnp.stack(ws)                      # (n_conv, ks*WC, WC) compute_dtype
    b_fused = jnp.stack(bs)[:, None, :]          # (n_conv, 1, WC) f32
    return w_fused, b_fused


def _pick_images_per_step(N, H):
    b = max(1, 256 // H)                 # target M = B*H ~ 256 MXU rows
    if N < 2 * b:                        # keep >= 2 grid steps (v7x: 2 TCs)
        b = max(1, N // 2) if N >= 2 else 1
    return min(b, N)


# ----------------------------------------------------------------------------
# Module forward:  LkResblocks(x) = x + res3(res2(res1(x)))
# ----------------------------------------------------------------------------
@functools.partial(jax.jit, static_argnames=("images_per_step",))
def lk_resblocks_forward(x, w_fused, b_fused, *, images_per_step=None):
    """x: (N, H, W, C) NHWC; w_fused/b_fused from prepare_params()."""
    N, H, W, C = x.shape
    WC = W * C
    n_conv = w_fused.shape[0]
    n_blocks = n_conv // 2
    ks = w_fused.shape[1] // WC
    p = ks // 2

    B = images_per_step or _pick_images_per_step(N, H)
    pad_n = (-N) % B                                  # handle N % B != 0
    x2d = x.reshape(N * H, WC)                        # lane-dense slab
    if pad_n:
        x2d = jnp.concatenate(
            [x2d, jnp.zeros((pad_n * H, WC), x.dtype)], axis=0)
    num_steps = (N + pad_n) // B
    M = B * H

    kernel = functools.partial(
        _fused_kernel, ks=ks, H=H, p=p, n_blocks=n_blocks, M=M, WC=WC,
        compute_dtype=w_fused.dtype)

    out2d = pl.pallas_call(
        kernel,
        out_shape=jax.ShapeDtypeStruct(((N + pad_n) * H, WC), x.dtype),
        grid=(num_steps,),
        in_specs=[
            pl.BlockSpec((M, WC), lambda n: (n, 0)),
            pl.BlockSpec(w_fused.shape, lambda n: (0, 0, 0)),   # VMEM resident
            pl.BlockSpec(b_fused.shape, lambda n: (0, 0, 0)),   # VMEM resident
        ],
        out_specs=pl.BlockSpec((M, WC), lambda n: (n, 0)),
        compiler_params=pltpu.CompilerParams(
            dimension_semantics=("parallel",)),
    )(x2d, w_fused, b_fused)

    return out2d[:N * H].reshape(N, H, W, C)


# ----------------------------------------------------------------------------
# Deterministic parameter init (mimics PyTorch Conv2d kaiming-uniform scale)
# ----------------------------------------------------------------------------
def init_params(key, nf, ks, n_blocks=3):
    params = []
    bound = 1.0 / np.sqrt(nf * ks * ks)
    for _ in range(n_blocks):
        key, k1, k2, k3, k4 = jax.random.split(key, 5)
        w1 = jax.random.uniform(k1, (ks, ks, nf, nf), jnp.float32, -bound, bound)
        b1 = jax.random.uniform(k2, (nf,), jnp.float32, -bound, bound)
        w2 = jax.random.uniform(k3, (ks, ks, nf, nf), jnp.float32, -bound, bound)
        b2 = jax.random.uniform(k4, (nf,), jnp.float32, -bound, bound)
        params.append((w1, b1, w2, b2))
    return params


# ----------------------------------------------------------------------------
# Pure-JAX reference for correctness check
# ----------------------------------------------------------------------------
def _conv_ref(x, w, b):
    y = jax.lax.conv_general_dilated(
        x, w, (1, 1), "SAME", dimension_numbers=("NHWC", "HWIO", "NHWC"))
    return y + b[None, None, None, :]


def _ref_forward(x, all_params):
    h = x
    for (w1, b1, w2, b2) in all_params:
        t = jnp.maximum(_conv_ref(h, w1, b1), 0.0)
        h = h + _conv_ref(t, w2, b2)
    return x + h


if __name__ == "__main__":
    # Small shapes consistent with the module (nf channels, square spatial).
    # W * nf = 16 * 8 = 128 -> exactly one lane-width for the fused layout.
    # N=16 with 8 images/step gives M = 128 MXU rows and a 2-step parallel grid.
    N, H, W, nf, ks = 16, 16, 16, 8, 3

    key = jax.random.PRNGKey(0)
    key, xkey = jax.random.split(key)
    x = jax.random.normal(xkey, (N, H, W, nf), jnp.float32)  # NHWC
    params = init_params(key, nf, ks)

    ref = jax.block_until_ready(_ref_forward(x, params))

    # f32 compute path (tight numerical check of the fused kernel structure).
    w_f32, b_f32 = prepare_params(params, W, compute_dtype=jnp.float32)
    out_f32 = jax.block_until_ready(lk_resblocks_forward(x, w_f32, b_f32))
    np.testing.assert_allclose(np.asarray(out_f32), np.asarray(ref),
                               rtol=5e-4, atol=5e-4)

    # bf16 matmul-operand path (native MXU rate; loose tolerance per review).
    w_bf16, b_bf16 = prepare_params(params, W, compute_dtype=jnp.bfloat16)
    out_bf16 = jax.block_until_ready(lk_resblocks_forward(x, w_bf16, b_bf16))
    np.testing.assert_allclose(np.asarray(out_bf16), np.asarray(ref),
                               rtol=1e-1, atol=1e-1)

    print("KERNEL_OK")
</pallas_src>

<mosaic_0001>
module attributes {stable_mosaic.version = 11 : i64} {
  func.func @_fused_kernel(%arg0: i32, %arg1: memref<128x128xf32, #tpu.memory_space<vmem>>, %arg2: memref<6x384x128xf32, #tpu.memory_space<vmem>>, %arg3: memref<6x1x128xf32, #tpu.memory_space<vmem>>, %arg4: memref<128x128xf32, #tpu.memory_space<vmem>>) attributes {dimension_semantics = [#tpu.dimension_semantics<parallel>], iteration_bounds = array<i64: 2>, scalar_prefetch = 0 : i64, scratch_operands = 0 : i64, tpu.core_type = #tpu.core_type<tc>, window_params = [{transform_indices = @transform_0, window_bounds = array<i64: 128, 128>}, {pipeline_mode = #tpu.pipeline_mode<synchronous>, transform_indices = @transform_1, window_bounds = array<i64: 6, 384, 128>}, {pipeline_mode = #tpu.pipeline_mode<synchronous>, transform_indices = @transform_2, window_bounds = array<i64: 6, 1, 128>}, {transform_indices = @transform_3, window_bounds = array<i64: 128, 128>}]} {
    %0 = tpu.iota {dimensions = array<i32: 0>} : vector<128x128xi32>
    %c16_i32 = arith.constant 16 : i32
    %c0_i32 = arith.constant 0 : i32
    %1 = arith.cmpi eq, %c16_i32, %c0_i32 : i32
    %c1_i32 = arith.constant 1 : i32
    %2 = arith.select %1, %c1_i32, %c16_i32 : i32
    %3 = vector.broadcast %2 : i32 to vector<128x128xi32>
    %4 = arith.remsi %0, %3 : vector<128x128xi32>
    %c0_i32_0 = arith.constant 0 : i32
    %5 = vector.broadcast %c0_i32_0 : i32 to vector<128x128xi32>
    %6 = arith.cmpi ne, %4, %5 : vector<128x128xi32>
    %c0_i32_1 = arith.constant 0 : i32
    %7 = vector.broadcast %c0_i32_1 : i32 to vector<128x128xi32>
    %8 = arith.cmpi slt, %4, %7 : vector<128x128xi32>
    %c0_i32_2 = arith.constant 0 : i32
    %9 = arith.cmpi slt, %2, %c0_i32_2 : i32
    %10 = vector.broadcast %9 : i1 to vector<128x128xi1>
    %11 = vector.broadcast %10 : vector<128x128xi1> to vector<128x128xi1>
    %12 = arith.xori %8, %11 : vector<128x128xi1>
    %13 = arith.andi %12, %6 : vector<128x128xi1>
    %14 = vector.broadcast %2 : i32 to vector<128x128xi32>
    %15 = arith.addi %4, %14 : vector<128x128xi32>
    %16 = arith.select %13, %15, %4 : vector<128x128xi1>, vector<128x128xi32>
    %c1_i32_3 = arith.constant 1 : i32
    %17 = vector.broadcast %c1_i32_3 : i32 to vector<128x128xi32>
    %18 = arith.cmpi slt, %16, %17 : vector<128x128xi32>
    %c15_i32 = arith.constant 15 : i32
    %19 = vector.broadcast %c15_i32 : i32 to vector<128x128xi32>
    %20 = arith.cmpi sge, %16, %19 : vector<128x128xi32>
    %c0 = arith.constant 0 : index
    %c0_4 = arith.constant 0 : index
    %21 = vector.load %arg1[%c0, %c0_4] : memref<128x128xf32, #tpu.memory_space<vmem>>, vector<128x128xf32>
    %c1_i32_5 = arith.constant 1 : i32
    %22 = tpu.dynamic_rotate %21 by %c1_i32_5 dim 0 : vector<128x128xf32>, i32 -> vector<128x128xf32>
    %cst = arith.constant 0.000000e+00 : f32
    %23 = vector.broadcast %cst : f32 to vector<128x128xf32>
    %24 = arith.select %18, %23, %22 : vector<128x128xi1>, vector<128x128xf32>
    %c127_i32 = arith.constant 127 : i32
    %25 = tpu.dynamic_rotate %21 by %c127_i32 dim 0 : vector<128x128xf32>, i32 -> vector<128x128xf32>
    %cst_6 = arith.constant 0.000000e+00 : f32
    %26 = vector.broadcast %cst_6 : f32 to vector<128x128xf32>
    %27 = arith.select %20, %26, %25 : vector<128x128xi1>, vector<128x128xf32>
    %28 = tpu.concatenate %24, %21, %27 in 1 : vector<128x128xf32>, vector<128x128xf32>, vector<128x128xf32> -> vector<128x384xf32>
    %c0_7 = arith.constant 0 : index
    %c0_8 = arith.constant 0 : index
    %c0_9 = arith.constant 0 : index
    %29 = vector.load %arg2[%c0_7, %c0_8, %c0_9] : memref<6x384x128xf32, #tpu.memory_space<vmem>>, vector<1x384x128xf32>
    %30 = vector.shape_cast %29 : vector<1x384x128xf32> to vector<384x128xf32>
    %cst_10 = arith.constant dense<0.000000e+00> : vector<128x128xf32>
    %31 = tpu.matmul %28, %30, %cst_10 {dimension_numbers = #tpu.dot_dimension_numbers<[1], [0], [0], [1], [0, 0, 1, 1], [], []>} : vector<128x384xf32>, vector<384x128xf32>, vector<128x128xf32> -> vector<128x128xf32>
    %c0_11 = arith.constant 0 : index
    %c0_12 = arith.constant 0 : index
    %c0_13 = arith.constant 0 : index
    %32 = vector.load %arg3[%c0_11, %c0_12, %c0_13] : memref<6x1x128xf32, #tpu.memory_space<vmem>>, vector<1x1x128xf32>
    %33 = vector.shape_cast %32 : vector<1x1x128xf32> to vector<1x128xf32>
    %34 = vector.broadcast %33 : vector<1x128xf32> to vector<128x128xf32>
    %35 = arith.addf %31, %34 : vector<128x128xf32>
    %cst_14 = arith.constant 0.000000e+00 : f32
    %36 = vector.broadcast %cst_14 : f32 to vector<128x128xf32>
    %37 = arith.maximumf %35, %36 : vector<128x128xf32>
    %c1_i32_15 = arith.constant 1 : i32
    %38 = tpu.dynamic_rotate %37 by %c1_i32_15 dim 0 : vector<128x128xf32>, i32 -> vector<128x128xf32>
    %cst_16 = arith.constant 0.000000e+00 : f32
    %39 = vector.broadcast %cst_16 : f32 to vector<128x128xf32>
    %40 = arith.select %18, %39, %38 : vector<128x128xi1>, vector<128x128xf32>
    %c127_i32_17 = arith.constant 127 : i32
    %41 = tpu.dynamic_rotate %37 by %c127_i32_17 dim 0 : vector<128x128xf32>, i32 -> vector<128x128xf32>
    %cst_18 = arith.constant 0.000000e+00 : f32
    %42 = vector.broadcast %cst_18 : f32 to vector<128x128xf32>
    %43 = arith.select %20, %42, %41 : vector<128x128xi1>, vector<128x128xf32>
    %44 = tpu.concatenate %40, %37, %43 in 1 : vector<128x128xf32>, vector<128x128xf32>, vector<128x128xf32> -> vector<128x384xf32>
    %c1 = arith.constant 1 : index
    %c0_19 = arith.constant 0 : index
    %c0_20 = arith.constant 0 : index
    %45 = vector.load %arg2[%c1, %c0_19, %c0_20] : memref<6x384x128xf32, #tpu.memory_space<vmem>>, vector<1x384x128xf32>
    %46 = vector.shape_cast %45 : vector<1x384x128xf32> to vector<384x128xf32>
    %cst_21 = arith.constant dense<0.000000e+00> : vector<128x128xf32>
    %47 = tpu.matmul %44, %46, %cst_21 {dimension_numbers = #tpu.dot_dimension_numbers<[1], [0], [0], [1], [0, 0, 1, 1], [], []>} : vector<128x384xf32>, vector<384x128xf32>, vector<128x128xf32> -> vector<128x128xf32>
    %c1_22 = arith.constant 1 : index
    %c0_23 = arith.constant 0 : index
    %c0_24 = arith.constant 0 : index
    %48 = vector.load %arg3[%c1_22, %c0_23, %c0_24] : memref<6x1x128xf32, #tpu.memory_space<vmem>>, vector<1x1x128xf32>
    %49 = vector.shape_cast %48 : vector<1x1x128xf32> to vector<1x128xf32>
    %50 = vector.broadcast %49 : vector<1x128xf32> to vector<128x128xf32>
    %51 = arith.addf %47, %50 : vector<128x128xf32>
    %52 = arith.addf %21, %51 : vector<128x128xf32>
    %c1_i32_25 = arith.constant 1 : i32
    %53 = tpu.dynamic_rotate %52 by %c1_i32_25 dim 0 : vector<128x128xf32>, i32 -> vector<128x128xf32>
    %cst_26 = arith.constant 0.000000e+00 : f32
    %54 = vector.broadcast %cst_26 : f32 to vector<128x128xf32>
    %55 = arith.select %18, %54, %53 : vector<128x128xi1>, vector<128x128xf32>
    %c127_i32_27 = arith.constant 127 : i32
    %56 = tpu.dynamic_rotate %52 by %c127_i32_27 dim 0 : vector<128x128xf32>, i32 -> vector<128x128xf32>
    %cst_28 = arith.constant 0.000000e+00 : f32
    %57 = vector.broadcast %cst_28 : f32 to vector<128x128xf32>
    %58 = arith.select %20, %57, %56 : vector<128x128xi1>, vector<128x128xf32>
    %59 = tpu.concatenate %55, %52, %58 in 1 : vector<128x128xf32>, vector<128x128xf32>, vector<128x128xf32> -> vector<128x384xf32>
    %c2 = arith.constant 2 : index
    %c0_29 = arith.constant 0 : index
    %c0_30 = arith.constant 0 : index
    %60 = vector.load %arg2[%c2, %c0_29, %c0_30] : memref<6x384x128xf32, #tpu.memory_space<vmem>>, vector<1x384x128xf32>
    %61 = vector.shape_cast %60 : vector<1x384x128xf32> to vector<384x128xf32>
    %cst_31 = arith.constant dense<0.000000e+00> : vector<128x128xf32>
    %62 = tpu.matmul %59, %61, %cst_31 {dimension_numbers = #tpu.dot_dimension_numbers<[1], [0], [0], [1], [0, 0, 1, 1], [], []>} : vector<128x384xf32>, vector<384x128xf32>, vector<128x128xf32> -> vector<128x128xf32>
    %c2_32 = arith.constant 2 : index
    %c0_33 = arith.constant 0 : index
    %c0_34 = arith.constant 0 : index
    %63 = vector.load %arg3[%c2_32, %c0_33, %c0_34] : memref<6x1x128xf32, #tpu.memory_space<vmem>>, vector<1x1x128xf32>
    %64 = vector.shape_cast %63 : vector<1x1x128xf32> to vector<1x128xf32>
    %65 = vector.broadcast %64 : vector<1x128xf32> to vector<128x128xf32>
    %66 = arith.addf %62, %65 : vector<128x128xf32>
    %cst_35 = arith.constant 0.000000e+00 : f32
    %67 = vector.broadcast %cst_35 : f32 to vector<128x128xf32>
    %68 = arith.maximumf %66, %67 : vector<128x128xf32>
    %c1_i32_36 = arith.constant 1 : i32
    %69 = tpu.dynamic_rotate %68 by %c1_i32_36 dim 0 : vector<128x128xf32>, i32 -> vector<128x128xf32>
    %cst_37 = arith.constant 0.000000e+00 : f32
    %70 = vector.broadcast %cst_37 : f32 to vector<128x128xf32>
    %71 = arith.select %18, %70, %69 : vector<128x128xi1>, vector<128x128xf32>
    %c127_i32_38 = arith.constant 127 : i32
    %72 = tpu.dynamic_rotate %68 by %c127_i32_38 dim 0 : vector<128x128xf32>, i32 -> vector<128x128xf32>
    %cst_39 = arith.constant 0.000000e+00 : f32
    %73 = vector.broadcast %cst_39 : f32 to vector<128x128xf32>
    %74 = arith.select %20, %73, %72 : vector<128x128xi1>, vector<128x128xf32>
    %75 = tpu.concatenate %71, %68, %74 in 1 : vector<128x128xf32>, vector<128x128xf32>, vector<128x128xf32> -> vector<128x384xf32>
    %c3 = arith.constant 3 : index
    %c0_40 = arith.constant 0 : index
    %c0_41 = arith.constant 0 : index
    %76 = vector.load %arg2[%c3, %c0_40, %c0_41] : memref<6x384x128xf32, #tpu.memory_space<vmem>>, vector<1x384x128xf32>
    %77 = vector.shape_cast %76 : vector<1x384x128xf32> to vector<384x128xf32>
    %cst_42 = arith.constant dense<0.000000e+00> : vector<128x128xf32>
    %78 = tpu.matmul %75, %77, %cst_42 {dimension_numbers = #tpu.dot_dimension_numbers<[1], [0], [0], [1], [0, 0, 1, 1], [], []>} : vector<128x384xf32>, vector<384x128xf32>, vector<128x128xf32> -> vector<128x128xf32>
    %c3_43 = arith.constant 3 : index
    %c0_44 = arith.constant 0 : index
    %c0_45 = arith.constant 0 : index
    %79 = vector.load %arg3[%c3_43, %c0_44, %c0_45] : memref<6x1x128xf32, #tpu.memory_space<vmem>>, vector<1x1x128xf32>
    %80 = vector.shape_cast %79 : vector<1x1x128xf32> to vector<1x128xf32>
    %81 = vector.broadcast %80 : vector<1x128xf32> to vector<128x128xf32>
    %82 = arith.addf %78, %81 : vector<128x128xf32>
    %83 = arith.addf %52, %82 : vector<128x128xf32>
    %c1_i32_46 = arith.constant 1 : i32
    %84 = tpu.dynamic_rotate %83 by %c1_i32_46 dim 0 : vector<128x128xf32>, i32 -> vector<128x128xf32>
    %cst_47 = arith.constant 0.000000e+00 : f32
    %85 = vector.broadcast %cst_47 : f32 to vector<128x128xf32>
    %86 = arith.select %18, %85, %84 : vector<128x128xi1>, vector<128x128xf32>
    %c127_i32_48 = arith.constant 127 : i32
    %87 = tpu.dynamic_rotate %83 by %c127_i32_48 dim 0 : vector<128x128xf32>, i32 -> vector<128x128xf32>
    %cst_49 = arith.constant 0.000000e+00 : f32
    %88 = vector.broadcast %cst_49 : f32 to vector<128x128xf32>
    %89 = arith.select %20, %88, %87 : vector<128x128xi1>, vector<128x128xf32>
    %90 = tpu.concatenate %86, %83, %89 in 1 : vector<128x128xf32>, vector<128x128xf32>, vector<128x128xf32> -> vector<128x384xf32>
    %c4 = arith.constant 4 : index
    %c0_50 = arith.constant 0 : index
    %c0_51 = arith.constant 0 : index
    %91 = vector.load %arg2[%c4, %c0_50, %c0_51] : memref<6x384x128xf32, #tpu.memory_space<vmem>>, vector<1x384x128xf32>
    %92 = vector.shape_cast %91 : vector<1x384x128xf32> to vector<384x128xf32>
    %cst_52 = arith.constant dense<0.000000e+00> : vector<128x128xf32>
    %93 = tpu.matmul %90, %92, %cst_52 {dimension_numbers = #tpu.dot_dimension_numbers<[1], [0], [0], [1], [0, 0, 1, 1], [], []>} : vector<128x384xf32>, vector<384x128xf32>, vector<128x128xf32> -> vector<128x128xf32>
    %c4_53 = arith.constant 4 : index
    %c0_54 = arith.constant 0 : index
    %c0_55 = arith.constant 0 : index
    %94 = vector.load %arg3[%c4_53, %c0_54, %c0_55] : memref<6x1x128xf32, #tpu.memory_space<vmem>>, vector<1x1x128xf32>
    %95 = vector.shape_cast %94 : vector<1x1x128xf32> to vector<1x128xf32>
    %96 = vector.broadcast %95 : vector<1x128xf32> to vector<128x128xf32>
    %97 = arith.addf %93, %96 : vector<128x128xf32>
    %cst_56 = arith.constant 0.000000e+00 : f32
    %98 = vector.broadcast %cst_56 : f32 to vector<128x128xf32>
    %99 = arith.maximumf %97, %98 : vector<128x128xf32>
    %c1_i32_57 = arith.constant 1 : i32
    %100 = tpu.dynamic_rotate %99 by %c1_i32_57 dim 0 : vector<128x128xf32>, i32 -> vector<128x128xf32>
    %cst_58 = arith.constant 0.000000e+00 : f32
    %101 = vector.broadcast %cst_58 : f32 to vector<128x128xf32>
    %102 = arith.select %18, %101, %100 : vector<128x128xi1>, vector<128x128xf32>
    %c127_i32_59 = arith.constant 127 : i32
    %103 = tpu.dynamic_rotate %99 by %c127_i32_59 dim 0 : vector<128x128xf32>, i32 -> vector<128x128xf32>
    %cst_60 = arith.constant 0.000000e+00 : f32
    %104 = vector.broadcast %cst_60 : f32 to vector<128x128xf32>
    %105 = arith.select %20, %104, %103 : vector<128x128xi1>, vector<128x128xf32>
    %106 = tpu.concatenate %102, %99, %105 in 1 : vector<128x128xf32>, vector<128x128xf32>, vector<128x128xf32> -> vector<128x384xf32>
    %c5 = arith.constant 5 : index
    %c0_61 = arith.constant 0 : index
    %c0_62 = arith.constant 0 : index
    %107 = vector.load %arg2[%c5, %c0_61, %c0_62] : memref<6x384x128xf32, #tpu.memory_space<vmem>>, vector<1x384x128xf32>
    %108 = vector.shape_cast %107 : vector<1x384x128xf32> to vector<384x128xf32>
    %cst_63 = arith.constant dense<0.000000e+00> : vector<128x128xf32>
    %109 = tpu.matmul %106, %108, %cst_63 {dimension_numbers = #tpu.dot_dimension_numbers<[1], [0], [0], [1], [0, 0, 1, 1], [], []>} : vector<128x384xf32>, vector<384x128xf32>, vector<128x128xf32> -> vector<128x128xf32>
    %c5_64 = arith.constant 5 : index
    %c0_65 = arith.constant 0 : index
    %c0_66 = arith.constant 0 : index
    %110 = vector.load %arg3[%c5_64, %c0_65, %c0_66] : memref<6x1x128xf32, #tpu.memory_space<vmem>>, vector<1x1x128xf32>
    %111 = vector.shape_cast %110 : vector<1x1x128xf32> to vector<1x128xf32>
    %112 = vector.broadcast %111 : vector<1x128xf32> to vector<128x128xf32>
    %113 = arith.addf %109, %112 : vector<128x128xf32>
    %114 = arith.addf %83, %113 : vector<128x128xf32>
    %115 = arith.addf %21, %114 : vector<128x128xf32>
    %c0_67 = arith.constant 0 : index
    %c0_68 = arith.constant 0 : index
    %116 = vector.load %arg4[%c0_67, %c0_68] : memref<128x128xf32, #tpu.memory_space<vmem>>, vector<128x128xf32>
    tpu.vector_store %arg4[%c0_67, %c0_68], %115 {strides = array<i32>} : memref<128x128xf32, #tpu.memory_space<vmem>>, vector<128x128xf32>,
    return
  }
  func.func @transform_0(%arg0: i32) -> (i32, i32) {
    %c0_i32 = arith.constant 0 : i32
    %c0_i32_0 = arith.constant 0 : i32
    return %arg0, %c0_i32 : i32, i32
  }
  func.func @transform_1(%arg0: i32) -> (i32, i32, i32) {
    %c0_i32 = arith.constant 0 : i32
    %c0_i32_0 = arith.constant 0 : i32
    %c0_i32_1 = arith.constant 0 : i32
    %c0_i32_2 = arith.constant 0 : i32
    return %c0_i32, %c0_i32_0, %c0_i32_1 : i32, i32, i32
  }
  func.func @transform_2(%arg0: i32) -> (i32, i32, i32) {
    %c0_i32 = arith.constant 0 : i32
    %c0_i32_0 = arith.constant 0 : i32
    %c0_i32_1 = arith.constant 0 : i32
    %c0_i32_2 = arith.constant 0 : i32
    return %c0_i32, %c0_i32_0, %c0_i32_1 : i32, i32, i32
  }
  func.func @transform_3(%arg0: i32) -> (i32, i32) {
    %c0_i32 = arith.constant 0 : i32
    %c0_i32_0 = arith.constant 0 : i32
    return %arg0, %c0_i32 : i32, i32
  }
}

</mosaic_0001>

<llo_original>
// kernel: lk_resblocks_forward.1
$region0: #{lk_resblocks_forward.1}
  #allocation0 [shape = 'u32[]', space=smem, size = 0x4, offset = 0x4, fixed_abs, tag = 'smem constant byte address 0x4 - core index']
  #allocation1 [shape = 'u32[72,128]{1,0:T(1,128)}', space=vmem, size = 0x9000, scoped, tag = 'internal scratch']
  %s0 = inlined_call_operand.vmem [shape: f32[256,128], index: 0, kind: input, shape index: {}]
  %s1 = inlined_call_operand.vmem [shape: f32[6,384,128], index: 1, kind: input, shape index: {}]
  %s2 = inlined_call_operand.vmem [shape: f32[6,1,128], index: 2, kind: input, shape index: {}]
  %s3 = inlined_call_operand.vmem [shape: f32[256,128], index: 3, kind: output, shape index: {}]
  %s4 = sld [smem:[#allocation0]]
  $region45: #{lk_resblocks_forward.1} parent=0
    _
  %s6 = ssub.s32 1, %s4
  %s7 = scalar_select 0, %s6, %s4
  loop: start=0, step=1, limit=4
  $region2: #{lk_resblocks_forward.1} parent=0 // loop_pre_header
    _
  $region3: #{lk_resblocks_forward.1} parent=0 // loop_header
    %s9 = sphi 0, %s13
    %p10 = scmp.ge.s32.totalorder %s9, 4
    %s19 = sphi 0, %s21
    %s22 = sphi 0, %s19
    %s23 = sphi 0, %s22
    %s39 = sphi 0, %s23
    %s43 = sphi 0, %s43
    %s45 = sphi 0, %s43
    %s46 = sphi 0, %s45
    %s60 = sphi 0, %s46
    %s64 = sphi 0, %s64
    %s66 = sphi 0, %s64
    %s67 = sphi 0, %s66
    %s81 = sphi 0, %s67
    %s87 = sphi 0, %s89
    %s90 = sphi 0, %s87
    %s91 = sphi 0, %s90
    %s107 = sphi 0, %s91
  $region4: #{lk_resblocks_forward.1} parent=0 // loop_header_branch
    %12 = sbr.rel (%p10) target = $region8
  $region5: #{lk_resblocks_forward.1} parent=0 // loop_body
    %s14 = ssub.s32 %s9, 1
    %s15 = ssub.s32 %s9, 2
    %s16 = sadd.s32 %s9, 1
    %s17 = ssub.s32 %s9, %s16
    %p18 = scmp.eq.s32.totalorder %s17, 0
    %s20 = sadd.s32 %s19, 1
    %s21 = scalar_select %p18, %s19, %s20
    %p24 = pneg %p18
    %p25 = scmp.eq.s32.totalorder %s9, 1
    %p26 = por %p24, %p25
    %p27 = scmp.ne.s32.totalorder %s19, %s22
    %p28 = scmp.eq.s32.totalorder %s9, 0
    %p29 = por %p27, %p28
    %p30 = scmp.ne.s32.totalorder %s19, %s22
    %p31 = scmp.eq.s32.totalorder %s14, 1
    %p32 = por %p30, %p31
    %p33 = scmp.ne.s32.totalorder %s22, %s23
    %p34 = scmp.eq.s32.totalorder %s14, 0
    %p35 = por %p33, %p34
    %p36 = scmp.ne.s32.totalorder %s22, %s23
    %p37 = scmp.eq.s32.totalorder %s15, 1
    %p38 = por %p36, %p37
    %p40 = scmp.ne.s32.totalorder %s23, %s39
    %p41 = scmp.eq.s32.totalorder %s15, 0
    %p42 = por %p40, %p41
    %s44 = sadd.s32 %s43, 1
    %p47 = scmp.eq.s32.totalorder %s9, 1
    %p48 = scmp.ne.s32.totalorder %s43, %s45
    %p49 = scmp.eq.s32.totalorder %s9, 0
    %p50 = por %p48, %p49
    %p51 = scmp.ne.s32.totalorder %s43, %s45
    %p52 = scmp.eq.s32.totalorder %s14, 1
    %p53 = por %p51, %p52
    %p54 = scmp.ne.s32.totalorder %s45, %s46
    %p55 = scmp.eq.s32.totalorder %s14, 0
    %p56 = por %p54, %p55
    %p57 = scmp.ne.s32.totalorder %s45, %s46
    %p58 = scmp.eq.s32.totalorder %s15, 1
    %p59 = por %p57, %p58
    %p61 = scmp.ne.s32.totalorder %s46, %s60
    %p62 = scmp.eq.s32.totalorder %s15, 0
    %p63 = por %p61, %p62
    %s65 = sadd.s32 %s64, 1
    %p68 = scmp.eq.s32.totalorder %s9, 1
    %p69 = scmp.ne.s32.totalorder %s64, %s66
    %p70 = scmp.eq.s32.totalorder %s9, 0
    %p71 = por %p69, %p70
    %p72 = scmp.ne.s32.totalorder %s64, %s66
    %p73 = scmp.eq.s32.totalorder %s14, 1
    %p74 = por %p72, %p73
    %p75 = scmp.ne.s32.totalorder %s66, %s67
    %p76 = scmp.eq.s32.totalorder %s14, 0
    %p77 = por %p75, %p76
    %p78 = scmp.ne.s32.totalorder %s66, %s67
    %p79 = scmp.eq.s32.totalorder %s15, 1
    %p80 = por %p78, %p79
    %p82 = scmp.ne.s32.totalorder %s67, %s81
    %p83 = scmp.eq.s32.totalorder %s15, 0
    %p84 = por %p82, %p83
    %s85 = ssub.s32 %s9, %s16
    %p86 = scmp.eq.s32.totalorder %s85, 0
    %s88 = sadd.s32 %s87, 1
    %s89 = scalar_select %p86, %s87, %s88
    %p92 = pneg %p86
    %p93 = scmp.eq.s32.totalorder %s9, 1
    %p94 = por %p92, %p93
    %p95 = scmp.ne.s32.totalorder %s87, %s90
    %p96 = scmp.eq.s32.totalorder %s9, 0
    %p97 = por %p95, %p96
    %p98 = scmp.ne.s32.totalorder %s87, %s90
    %p99 = scmp.eq.s32.totalorder %s14, 1
    %p100 = por %p98, %p99
    %p101 = scmp.ne.s32.totalorder %s90, %s91
    %p102 = scmp.eq.s32.totalorder %s14, 0
    %p103 = por %p101, %p102
    %p104 = scmp.ne.s32.totalorder %s90, %s91
    %p105 = scmp.eq.s32.totalorder %s15, 1
    %p106 = por %p104, %p105
    %p108 = scmp.ne.s32.totalorder %s91, %s107
    %p109 = scmp.eq.s32.totalorder %s15, 0
    %p110 = por %p108, %p109
    %p111 = scmp.le.s32.totalorder 1, %s9
    %p112 = scmp.lt.s32.totalorder %s9, 3
    %p113 = pnand %p111, %p112
    %p114 = pneg %p113
    // Predicated region
    $region9: #{lk_resblocks_forward.1} parent=5 // pred_check
      _
    $region10: #{lk_resblocks_forward.1} parent=5 // pred_check_branch
      %116 = sbr.rel (%p113) target = $region12
    $region11: #{lk_resblocks_forward.1} parent=5 // pred_region
      %s117 = ssub.s32 %s9, 1
      // Predicated region
      $region13: #{lk_resblocks_forward.1} parent=11 // pred_check
        %p118 = pneg %p56
      $region14: #{lk_resblocks_forward.1} parent=11 // pred_check_branch
        %120 = sbr.rel (%p118) target = $region16
      $region15: #{lk_resblocks_forward.1} parent=11 // pred_region
        _
      $region16: #{lk_resblocks_forward.1} parent=11 // pred_fallthru
        _
      // Predicated region
      $region17: #{lk_resblocks_forward.1} parent=11 // pred_check
        %p121 = pneg %p77
      $region18: #{lk_resblocks_forward.1} parent=11 // pred_check_branch
        %123 = sbr.rel (%p121) target = $region20
      $region19: #{lk_resblocks_forward.1} parent=11 // pred_region
        _
      $region20: #{lk_resblocks_forward.1} parent=11 // pred_fallthru
        _
    $region12: #{lk_resblocks_forward.1} parent=5 // pred_fallthru
      _
    %p124 = scmp.lt.s32.totalorder %s9, 2
    // Predicated region
    $region21: #{lk_resblocks_forward.1} parent=5 // pred_check
      %p125 = pneg %p124
    $region22: #{lk_resblocks_forward.1} parent=5 // pred_check_branch
      %127 = sbr.rel (%p125) target = $region24
    $region23: #{lk_resblocks_forward.1} parent=5 // pred_region
      // Predicated region
      $region25: #{lk_resblocks_forward.1} parent=23 // pred_check
        %p128 = pneg %p29
      $region26: #{lk_resblocks_forward.1} parent=23 // pred_check_branch
        %130 = sbr.rel (%p128) target = $region28
      $region27: #{lk_resblocks_forward.1} parent=23 // pred_region
        %s131 = smul.u32 16, %s9
        %p132 = scmp.lt.s32.totalorder %s131, 31
        %s133 = scalar_select %p132, %s131, 31
        %s134 = smul.addr %s133, 8
        %s135 = scalar_lea.vmem %s0, %s134
        %s136 = smul.u32 16, %s9
      $region28: #{lk_resblocks_forward.1} parent=23 // pred_fallthru
        _
    $region24: #{lk_resblocks_forward.1} parent=5 // pred_fallthru
      _
    %p137 = scmp.le.s32.totalorder 1, %s9
    %p138 = scmp.lt.s32.totalorder %s9, 3
    %p139 = pnand %p137, %p138
    %p140 = pneg %p139
    // Predicated region
    $region29: #{lk_resblocks_forward.1} parent=5 // pred_check
      _
    $region30: #{lk_resblocks_forward.1} parent=5 // pred_check_branch
      %142 = sbr.rel (%p139) target = $region32
    $region31: #{lk_resblocks_forward.1} parent=5 // pred_region
      %s143 = ssub.s32 %s9, 1
      %s144 = smul.u32 16, %s14
      %p145 = scmp.lt.s32.totalorder %s144, 31
      %s146 = scalar_select %p145, %s144, 31
      %s147 = smul.addr %s146, 8
      %s148 = scalar_lea.vmem %s0, %s147
      %p149 = pneg %p35
      %p150 = pneg %p32
      %p151 = pneg %p56
      %p152 = pneg %p53
      %p153 = pneg %p77
      %p154 = pneg %p74
      %p155 = pneg %p103
      %p156 = pneg %p100
      %s157 = smul.u32 16, %s14
      %p158 = scmp.lt.s32.totalorder %s157, 31
      %s159 = scalar_select %p158, %s157, 31
      %s160 = smul.addr %s159, 8
      %s161 = scalar_lea.vmem %s3, %s160
      %s162 = smul.u32 16, %s14
      %p163 = scmp.lt.s32.totalorder %s162, 31
      %s164 = scalar_select %p163, %s162, 31
      %s165 = smul.addr %s164, 8
      %s166 = scalar_lea.vmem %s0, %s165
      %s167 = smul.u32 16, %s14
      %s168 = smul.u32 16, %s14
      %p169 = scmp.lt.s32.totalorder %s168, 31
      %s170 = scalar_select %p169, %s168, 31
      %s171 = smul.addr %s170, 8
      %s172 = scalar_lea.vmem %s3, %s171
      %s173 = smul.u32 16, %s14
      %v174 = vlaneseq
      %v175 = vshrl.u32 %v174, 7
      %v176 = vadd.s32 %v175, 8
      %v177 = vadd.s32 %v175, 16
      %v178 = vadd.s32 %v175, 24
      %v179 = vadd.s32 %v175, 32
      %v180 = vadd.s32 %v175, 40
      %v181 = vadd.s32 %v175, 48
      %v182 = vadd.s32 %v175, 56
      %v183 = vadd.s32 %v175, 64
      %v184 = vadd.s32 %v175, 72
      %v185 = vadd.s32 %v175, 80
      %v186 = vadd.s32 %v175, 88
      %v187 = vadd.s32 %v175, 96
      %v188 = vadd.s32 %v175, 104
      %v189 = vadd.s32 %v175, 112
      %v190 = vadd.s32 %v175, 120
      %vm191 = vcmp.lt.s32.totalorder %v175, 0
      %v192 = vsub.s32 0, %v175
      %v193 = vsel %vm191, %v192, %v175
      %v194 = vshrl.u32 %v193, 4
      %v195 = vand.u32 %v193, 15
      %v196 = vsub.s32 0, %v195
      %v197 = vsel %vm191, %v196, %v195
      %vm198 = vcmp.lt.s32.totalorder %v176, 0
      %v199 = vsub.s32 0, %v176
      %v200 = vsel %vm198, %v199, %v176
      %v201 = vshrl.u32 %v200, 4
      %v202 = vand.u32 %v200, 15
      %v203 = vsub.s32 0, %v202
      %v204 = vsel %vm198, %v203, %v202
      %vm205 = vcmp.lt.s32.totalorder %v177, 0
      %v206 = vsub.s32 0, %v177
      %v207 = vsel %vm205, %v206, %v177
      %v208 = vshrl.u32 %v207, 4
      %v209 = vand.u32 %v207, 15
      %v210 = vsub.s32 0, %v209
      %v211 = vsel %vm205, %v210, %v209
      %vm212 = vcmp.lt.s32.totalorder %v178, 0
      %v213 = vsub.s32 0, %v178
      %v214 = vsel %vm212, %v213, %v178
      %v215 = vshrl.u32 %v214, 4
      %v216 = vand.u32 %v214, 15
      %v217 = vsub.s32 0, %v216
      %v218 = vsel %vm212, %v217, %v216
      %vm219 = vcmp.lt.s32.totalorder %v179, 0
      %v220 = vsub.s32 0, %v179
      %v221 = vsel %vm219, %v220, %v179
      %v222 = vshrl.u32 %v221, 4
      %v223 = vand.u32 %v221, 15
      %v224 = vsub.s32 0, %v223
      %v225 = vsel %vm219, %v224, %v223
      %vm226 = vcmp.lt.s32.totalorder %v180, 0
      %v227 = vsub.s32 0, %v180
      %v228 = vsel %vm226, %v227, %v180
      %v229 = vshrl.u32 %v228, 4
      %v230 = vand.u32 %v228, 15
      %v231 = vsub.s32 0, %v230
      %v232 = vsel %vm226, %v231, %v230
      %vm233 = vcmp.lt.s32.totalorder %v181, 0
      %v234 = vsub.s32 0, %v181
      %v235 = vsel %vm233, %v234, %v181
      %v236 = vshrl.u32 %v235, 4
      %v237 = vand.u32 %v235, 15
      %v238 = vsub.s32 0, %v237
      %v239 = vsel %vm233, %v238, %v237
      %vm240 = vcmp.lt.s32.totalorder %v182, 0
      %v241 = vsub.s32 0, %v182
      %v242 = vsel %vm240, %v241, %v182
      %v243 = vshrl.u32 %v242, 4
      %v244 = vand.u32 %v242, 15
      %v245 = vsub.s32 0, %v244
      %v246 = vsel %vm240, %v245, %v244
      %vm247 = vcmp.lt.s32.totalorder %v183, 0
      %v248 = vsub.s32 0, %v183
      %v249 = vsel %vm247, %v248, %v183
      %v250 = vshrl.u32 %v249, 4
      %v251 = vand.u32 %v249, 15
      %v252 = vsub.s32 0, %v251
      %v253 = vsel %vm247, %v252, %v251
      %vm254 = vcmp.lt.s32.totalorder %v184, 0
      %v255 = vsub.s32 0, %v184
      %v256 = vsel %vm254, %v255, %v184
      %v257 = vshrl.u32 %v256, 4
      %v258 = vand.u32 %v256, 15
      %v259 = vsub.s32 0, %v258
      %v260 = vsel %vm254, %v259, %v258
      %vm261 = vcmp.lt.s32.totalorder %v185, 0
      %v262 = vsub.s32 0, %v185
      %v263 = vsel %vm261, %v262, %v185
      %v264 = vshrl.u32 %v263, 4
      %v265 = vand.u32 %v263, 15
      %v266 = vsub.s32 0, %v265
      %v267 = vsel %vm261, %v266, %v265
      %vm268 = vcmp.lt.s32.totalorder %v186, 0
      %v269 = vsub.s32 0, %v186
      %v270 = vsel %vm268, %v269, %v186
      %v271 = vshrl.u32 %v270, 4
      %v272 = vand.u32 %v270, 15
      %v273 = vsub.s32 0, %v272
      %v274 = vsel %vm268, %v273, %v272
      %vm275 = vcmp.lt.s32.totalorder %v187, 0
      %v276 = vsub.s32 0, %v187
      %v277 = vsel %vm275, %v276, %v187
      %v278 = vshrl.u32 %v277, 4
      %v279 = vand.u32 %v277, 15
      %v280 = vsub.s32 0, %v279
      %v281 = vsel %vm275, %v280, %v279
      %vm282 = vcmp.lt.s32.totalorder %v188, 0
      %v283 = vsub.s32 0, %v188
      %v284 = vsel %vm282, %v283, %v188
      %v285 = vshrl.u32 %v284, 4
      %v286 = vand.u32 %v284, 15
      %v287 = vsub.s32 0, %v286
      %v288 = vsel %vm282, %v287, %v286
      %vm289 = vcmp.lt.s32.totalorder %v189, 0
      %v290 = vsub.s32 0, %v189
      %v291 = vsel %vm289, %v290, %v189
      %v292 = vshrl.u32 %v291, 4
      %v293 = vand.u32 %v291, 15
      %v294 = vsub.s32 0, %v293
      %v295 = vsel %vm289, %v294, %v293
      %vm296 = vcmp.lt.s32.totalorder %v190, 0
      %v297 = vsub.s32 0, %v190
      %v298 = vsel %vm296, %v297, %v190
      %v299 = vshrl.u32 %v298, 4
      %v300 = vand.u32 %v298, 15
      %v301 = vsub.s32 0, %v300
      %v302 = vsel %vm296, %v301, %v300
      %vm303 = vcmp.ne.s32.totalorder %v197, 0
      %vm304 = vcmp.ne.s32.totalorder %v204, 0
      %vm305 = vcmp.ne.s32.totalorder %v211, 0
      %vm306 = vcmp.ne.s32.totalorder %v218, 0
      %vm307 = vcmp.ne.s32.totalorder %v225, 0
      %vm308 = vcmp.ne.s32.totalorder %v232, 0
      %vm309 = vcmp.ne.s32.totalorder %v239, 0
      %vm310 = vcmp.ne.s32.totalorder %v246, 0
      %vm311 = vcmp.ne.s32.totalorder %v253, 0
      %vm312 = vcmp.ne.s32.totalorder %v260, 0
      %vm313 = vcmp.ne.s32.totalorder %v267, 0
      %vm314 = vcmp.ne.s32.totalorder %v274, 0
      %vm315 = vcmp.ne.s32.totalorder %v281, 0
      %vm316 = vcmp.ne.s32.totalorder %v288, 0
      %vm317 = vcmp.ne.s32.totalorder %v295, 0
      %vm318 = vcmp.ne.s32.totalorder %v302, 0
      %vm319 = vcmp.lt.s32.totalorder %v197, 0
      %vm320 = vcmp.lt.s32.totalorder %v204, 0
      %vm321 = vcmp.lt.s32.totalorder %v211, 0
      %vm322 = vcmp.lt.s32.totalorder %v218, 0
      %vm323 = vcmp.lt.s32.totalorder %v225, 0
      %vm324 = vcmp.lt.s32.totalorder %v232, 0
      %vm325 = vcmp.lt.s32.totalorder %v239, 0
      %vm326 = vcmp.lt.s32.totalorder %v246, 0
      %vm327 = vcmp.lt.s32.totalorder %v253, 0
      %vm328 = vcmp.lt.s32.totalorder %v260, 0
      %vm329 = vcmp.lt.s32.totalorder %v267, 0
      %vm330 = vcmp.lt.s32.totalorder %v274, 0
      %vm331 = vcmp.lt.s32.totalorder %v281, 0
      %vm332 = vcmp.lt.s32.totalorder %v288, 0
      %vm333 = vcmp.lt.s32.totalorder %v295, 0
      %vm334 = vcmp.lt.s32.totalorder %v302, 0
      %vm335 = vmand %vm319, %vm303
      %vm336 = vmand %vm320, %vm304
      %vm337 = vmand %vm321, %vm305
      %vm338 = vmand %vm322, %vm306
      %vm339 = vmand %vm323, %vm307
      %vm340 = vmand %vm324, %vm308
      %vm341 = vmand %vm325, %vm309
      %vm342 = vmand %vm326, %vm310
      %vm343 = vmand %vm327, %vm311
      %vm344 = vmand %vm328, %vm312
      %vm345 = vmand %vm329, %vm313
      %vm346 = vmand %vm330, %vm314
      %vm347 = vmand %vm331, %vm315
      %vm348 = vmand %vm332, %vm316
      %vm349 = vmand %vm333, %vm317
      %vm350 = vmand %vm334, %vm318
      %v351 = vadd.s32 %v197, 16
      %v352 = vadd.s32 %v204, 16
      %v353 = vadd.s32 %v211, 16
      %v354 = vadd.s32 %v218, 16
      %v355 = vadd.s32 %v225, 16
      %v356 = vadd.s32 %v232, 16
      %v357 = vadd.s32 %v239, 16
      %v358 = vadd.s32 %v246, 16
      %v359 = vadd.s32 %v253, 16
      %v360 = vadd.s32 %v260, 16
      %v361 = vadd.s32 %v267, 16
      %v362 = vadd.s32 %v274, 16
      %v363 = vadd.s32 %v281, 16
      %v364 = vadd.s32 %v288, 16
      %v365 = vadd.s32 %v295, 16
      %v366 = vadd.s32 %v302, 16
      %v367 = vsel %vm335, %v351, %v197
      %v368 = vsel %vm336, %v352, %v204
      %v369 = vsel %vm337, %v353, %v211
      %v370 = vsel %vm338, %v354, %v218
      %v371 = vsel %vm339, %v355, %v225
      %v372 = vsel %vm340, %v356, %v232
      %v373 = vsel %vm341, %v357, %v239
      %v374 = vsel %vm342, %v358, %v246
      %v375 = vsel %vm343, %v359, %v253
      %v376 = vsel %vm344, %v360, %v260
      %v377 = vsel %vm345, %v361, %v267
      %v378 = vsel %vm346, %v362, %v274
      %v379 = vsel %vm347, %v363, %v281
      %v380 = vsel %vm348, %v364, %v288
      %v381 = vsel %vm349, %v365, %v295
      %v382 = vsel %vm350, %v366, %v302
      %vm383 = vcmp.lt.s32.totalorder %v367, 1
      %vm384 = vcmp.lt.s32.totalorder %v368, 1
      %vm385 = vcmp.lt.s32.totalorder %v369, 1
      %vm386 = vcmp.lt.s32.totalorder %v370, 1
      %vm387 = vcmp.lt.s32.totalorder %v371, 1
      %vm388 = vcmp.lt.s32.totalorder %v372, 1
      %vm389 = vcmp.lt.s32.totalorder %v373, 1
      %vm390 = vcmp.lt.s32.totalorder %v374, 1
      %vm391 = vcmp.lt.s32.totalorder %v375, 1
      %vm392 = vcmp.lt.s32.totalorder %v376, 1
      %vm393 = vcmp.lt.s32.totalorder %v377, 1
      %vm394 = vcmp.lt.s32.totalorder %v378, 1
      %vm395 = vcmp.lt.s32.totalorder %v379, 1
      %vm396 = vcmp.lt.s32.totalorder %v380, 1
      %vm397 = vcmp.lt.s32.totalorder %v381, 1
      %vm398 = vcmp.lt.s32.totalorder %v382, 1
      %vm399 = vcmp.ge.s32.totalorder %v367, 15
      %vm400 = vcmp.ge.s32.totalorder %v368, 15
      %vm401 = vcmp.ge.s32.totalorder %v369, 15
      %vm402 = vcmp.ge.s32.totalorder %v370, 15
      %vm403 = vcmp.ge.s32.totalorder %v371, 15
      %vm404 = vcmp.ge.s32.totalorder %v372, 15
      %vm405 = vcmp.ge.s32.totalorder %v373, 15
      %vm406 = vcmp.ge.s32.totalorder %v374, 15
      %vm407 = vcmp.ge.s32.totalorder %v375, 15
      %vm408 = vcmp.ge.s32.totalorder %v376, 15
      %vm409 = vcmp.ge.s32.totalorder %v377, 15
      %vm410 = vcmp.ge.s32.totalorder %v378, 15
      %vm411 = vcmp.ge.s32.totalorder %v379, 15
      %vm412 = vcmp.ge.s32.totalorder %v380, 15
      %vm413 = vcmp.ge.s32.totalorder %v381, 15
      %vm414 = vcmp.ge.s32.totalorder %v382, 15
      %v415 = vld [vmem:[%s166] sm:$0xff]
      %v416 = vld [vmem:[%s166 + $0x8] sm:$0xff]
      %v417 = vld [vmem:[%s166 + $0x10] sm:$0xff]
      %v418 = vld [vmem:[%s166 + $0x18] sm:$0xff]
      %v419 = vld [vmem:[%s166 + $0x20] sm:$0xff]
      %v420 = vld [vmem:[%s166 + $0x28] sm:$0xff]
      %v421 = vld [vmem:[%s166 + $0x30] sm:$0xff]
      %v422 = vld [vmem:[%s166 + $0x38] sm:$0xff]
      %v423 = vld [vmem:[%s166 + $0x40] sm:$0xff]
      %v424 = vld [vmem:[%s166 + $0x48] sm:$0xff]
      %v425 = vld [vmem:[%s166 + $0x50] sm:$0xff]
      %v426 = vld [vmem:[%s166 + $0x58] sm:$0xff]
      %v427 = vld [vmem:[%s166 + $0x60] sm:$0xff]
      %v428 = vld [vmem:[%s166 + $0x68] sm:$0xff]
      %v429 = vld [vmem:[%s166 + $0x70] sm:$0xff]
      %v430 = vld [vmem:[%s166 + $0x78] sm:$0xff]
      %v431 = vrot.slane %v415, 7
      %v432 = vrot.slane %v416, 7
      %v433 = vrot.slane %v417, 7
      %v434 = vrot.slane %v418, 7
      %v435 = vrot.slane %v419, 7
      %v436 = vrot.slane %v420, 7
      %v437 = vrot.slane %v421, 7
      %v438 = vrot.slane %v422, 7
      %v439 = vrot.slane %v423, 7
      %v440 = vrot.slane %v424, 7
      %v441 = vrot.slane %v425, 7
      %v442 = vrot.slane %v426, 7
      %v443 = vrot.slane %v427, 7
      %v444 = vrot.slane %v428, 7
      %v445 = vrot.slane %v429, 7
      %v446 = vrot.slane %v430, 7
      %vm447 = vcmp.lt.s32.totalorder %v175, 1
      %v448 = vsel %vm447, %v445, %v446
      %v449 = vsel %vm447, %v444, %v445
      %v450 = vsel %vm447, %v443, %v444
      %v451 = vsel %vm447, %v442, %v443
      %v452 = vsel %vm447, %v441, %v442
      %v453 = vsel %vm447, %v440, %v441
      %v454 = vsel %vm447, %v439, %v440
      %v455 = vsel %vm447, %v438, %v439
      %v456 = vsel %vm447, %v437, %v438
      %v457 = vsel %vm447, %v436, %v437
      %v458 = vsel %vm447, %v435, %v436
      %v459 = vsel %vm447, %v434, %v435
      %v460 = vsel %vm447, %v433, %v434
      %v461 = vsel %vm447, %v432, %v433
      %v462 = vsel %vm447, %v431, %v432
      %v463 = vsel %vm447, %v446, %v431
      %v464 = vsel %vm383, 0.0, %v463
      %v465 = vsel %vm384, 0.0, %v462
      %v466 = vsel %vm385, 0.0, %v461
      %v467 = vsel %vm386, 0.0, %v460
      %v468 = vsel %vm387, 0.0, %v459
      %v469 = vsel %vm388, 0.0, %v458
      %v470 = vsel %vm389, 0.0, %v457
      %v471 = vsel %vm390, 0.0, %v456
      %v472 = vsel %vm391, 0.0, %v455
      %v473 = vsel %vm392, 0.0, %v454
      %v474 = vsel %vm393, 0.0, %v453
      %v475 = vsel %vm394, 0.0, %v452
      %v476 = vsel %vm395, 0.0, %v451
      %v477 = vsel %vm396, 0.0, %v450
      %v478 = vsel %vm397, 0.0, %v449
      %v479 = vsel %vm398, 0.0, %v448
      %v480 = vrot.slane %v415, 1
      %v481 = vrot.slane %v416, 1
      %v482 = vrot.slane %v417, 1
      %v483 = vrot.slane %v418, 1
      %v484 = vrot.slane %v419, 1
      %v485 = vrot.slane %v420, 1
      %v486 = vrot.slane %v421, 1
      %v487 = vrot.slane %v422, 1
      %v488 = vrot.slane %v423, 1
      %v489 = vrot.slane %v424, 1
      %v490 = vrot.slane %v425, 1
      %v491 = vrot.slane %v426, 1
      %v492 = vrot.slane %v427, 1
      %v493 = vrot.slane %v428, 1
      %v494 = vrot.slane %v429, 1
      %v495 = vrot.slane %v430, 1
      %vm496 = vcmp.lt.s32.totalorder %v175, 7
      %v497 = vsel %vm496, %v494, %v495
      %v498 = vsel %vm496, %v493, %v494
      %v499 = vsel %vm496, %v492, %v493
      %v500 = vsel %vm496, %v491, %v492
      %v501 = vsel %vm496, %v490, %v491
      %v502 = vsel %vm496, %v489, %v490
      %v503 = vsel %vm496, %v488, %v489
      %v504 = vsel %vm496, %v487, %v488
      %v505 = vsel %vm496, %v486, %v487
      %v506 = vsel %vm496, %v485, %v486
      %v507 = vsel %vm496, %v484, %v485
      %v508 = vsel %vm496, %v483, %v484
      %v509 = vsel %vm496, %v482, %v483
      %v510 = vsel %vm496, %v481, %v482
      %v511 = vsel %vm496, %v480, %v481
      %v512 = vsel %vm496, %v495, %v480
      %v513 = vsel %vm399, 0.0, %v511
      %v514 = vsel %vm400, 0.0, %v510
      %v515 = vsel %vm401, 0.0, %v509
      %v516 = vsel %vm402, 0.0, %v508
      %v517 = vsel %vm403, 0.0, %v507
      %v518 = vsel %vm404, 0.0, %v506
      %v519 = vsel %vm405, 0.0, %v505
      %v520 = vsel %vm406, 0.0, %v504
      %v521 = vsel %vm407, 0.0, %v503
      %v522 = vsel %vm408, 0.0, %v502
      %v523 = vsel %vm409, 0.0, %v501
      %v524 = vsel %vm410, 0.0, %v500
      %v525 = vsel %vm411, 0.0, %v499
      %v526 = vsel %vm412, 0.0, %v498
      %v527 = vsel %vm413, 0.0, %v497
      %v528 = vsel %vm414, 0.0, %v512
      %v529 = vld [vmem:[%s1] sm:$0xff]
      %v530 = vld [vmem:[%s1 + $0x8] sm:$0xff]
      %v531 = vld [vmem:[%s1 + $0x10] sm:$0xff]
      %v532 = vld [vmem:[%s1 + $0x18] sm:$0xff]
      %v533 = vld [vmem:[%s1 + $0x20] sm:$0xff]
      %v534 = vld [vmem:[%s1 + $0x28] sm:$0xff]
      %v535 = vld [vmem:[%s1 + $0x30] sm:$0xff]
      %v536 = vld [vmem:[%s1 + $0x38] sm:$0xff]
      %v537 = vld [vmem:[%s1 + $0x40] sm:$0xff]
      %v538 = vld [vmem:[%s1 + $0x48] sm:$0xff]
      %v539 = vld [vmem:[%s1 + $0x50] sm:$0xff]
      %v540 = vld [vmem:[%s1 + $0x58] sm:$0xff]
      %v541 = vld [vmem:[%s1 + $0x60] sm:$0xff]
      %v542 = vld [vmem:[%s1 + $0x68] sm:$0xff]
      %v543 = vld [vmem:[%s1 + $0x70] sm:$0xff]
      %v544 = vld [vmem:[%s1 + $0x78] sm:$0xff]
      %v545 = vld [vmem:[%s1 + $0x80] sm:$0xff]
      %v546 = vld [vmem:[%s1 + $0x88] sm:$0xff]
      %v547 = vld [vmem:[%s1 + $0x90] sm:$0xff]
      %v548 = vld [vmem:[%s1 + $0x98] sm:$0xff]
      %v549 = vld [vmem:[%s1 + $0xa0] sm:$0xff]
      %v550 = vld [vmem:[%s1 + $0xa8] sm:$0xff]
      %v551 = vld [vmem:[%s1 + $0xb0] sm:$0xff]
      %v552 = vld [vmem:[%s1 + $0xb8] sm:$0xff]
      %v553 = vld [vmem:[%s1 + $0xc0] sm:$0xff]
      %v554 = vld [vmem:[%s1 + $0xc8] sm:$0xff]
      %v555 = vld [vmem:[%s1 + $0xd0] sm:$0xff]
      %v556 = vld [vmem:[%s1 + $0xd8] sm:$0xff]
      %v557 = vld [vmem:[%s1 + $0xe0] sm:$0xff]
      %v558 = vld [vmem:[%s1 + $0xe8] sm:$0xff]
      %v559 = vld [vmem:[%s1 + $0xf0] sm:$0xff]
      %v560 = vld [vmem:[%s1 + $0xf8] sm:$0xff]
      %v561 = vld [vmem:[%s1 + $0x100] sm:$0xff]
      %v562 = vld [vmem:[%s1 + $0x108] sm:$0xff]
      %v563 = vld [vmem:[%s1 + $0x110] sm:$0xff]
      %v564 = vld [vmem:[%s1 + $0x118] sm:$0xff]
      %v565 = vld [vmem:[%s1 + $0x120] sm:$0xff]
      %v566 = vld [vmem:[%s1 + $0x128] sm:$0xff]
      %v567 = vld [vmem:[%s1 + $0x130] sm:$0xff]
      %v568 = vld [vmem:[%s1 + $0x138] sm:$0xff]
      %v569 = vld [vmem:[%s1 + $0x140] sm:$0xff]
      %v570 = vld [vmem:[%s1 + $0x148] sm:$0xff]
      %v571 = vld [vmem:[%s1 + $0x150] sm:$0xff]
      %v572 = vld [vmem:[%s1 + $0x158] sm:$0xff]
      %v573 = vld [vmem:[%s1 + $0x160] sm:$0xff]
      %v574 = vld [vmem:[%s1 + $0x168] sm:$0xff]
      %v575 = vld [vmem:[%s1 + $0x170] sm:$0xff]
      %v576 = vld [vmem:[%s1 + $0x178] sm:$0xff]
      %v577 = vld [vmem:[%s2] sm:$0x1]
      %v579 = vperm.slane %v577, 0
      %581 = vmatpush.msra.mxu0 %v544
      %582 = vmatpush.msra.mxu0 %v543
      %583 = vmatpush.msra.mxu0 %v542
      %584 = vmatpush.msra.mxu0 %v541
      %585 = vmatpush.msra.mxu0 %v540
      %586 = vmatpush.msra.mxu0 %v539
      %587 = vmatpush.msra.mxu0 %v538
      %588 = vmatpush.msra.mxu0 %v537
      %589 = vmatpush.msra.mxu0 %v536
      %590 = vmatpush.msra.mxu0 %v535
      %591 = vmatpush.msra.mxu0 %v534
      %592 = vmatpush.msra.mxu0 %v533
      %593 = vmatpush.msra.mxu0 %v532
      %594 = vmatpush.msra.mxu0 %v531
      %595 = vmatpush.msra.mxu0 %v530
      %596 = vmatpush.msra.mxu0 %v529
      %597 = vmatmul.f32.gmra.mxu0 %v464
      %v598 = vpop.f32.mrf.mxu0
      %v599 = vadd.f32 %v579, %v598
      %600 = vmatmul.f32.gmra.mxu0 %v465
      %v601 = vpop.f32.mrf.mxu0
      %v602 = vadd.f32 %v579, %v601
      %603 = vmatmul.f32.gmra.mxu0 %v466
      %v604 = vpop.f32.mrf.mxu0
      %v605 = vadd.f32 %v579, %v604
      %606 = vmatmul.f32.gmra.mxu0 %v467
      %v607 = vpop.f32.mrf.mxu0
      %v608 = vadd.f32 %v579, %v607
      %609 = vmatmul.f32.gmra.mxu0 %v468
      %v610 = vpop.f32.mrf.mxu0
      %v611 = vadd.f32 %v579, %v610
      %612 = vmatmul.f32.gmra.mxu0 %v469
      %v613 = vpop.f32.mrf.mxu0
      %v614 = vadd.f32 %v579, %v613
      %615 = vmatmul.f32.gmra.mxu0 %v470
      %v616 = vpop.f32.mrf.mxu0
      %v617 = vadd.f32 %v579, %v616
      %618 = vmatmul.f32.gmra.mxu0 %v471
      %v619 = vpop.f32.mrf.mxu0
      %v620 = vadd.f32 %v579, %v619
      %621 = vmatmul.f32.gmra.mxu0 %v472
      %v622 = vpop.f32.mrf.mxu0
      %v623 = vadd.f32 %v579, %v622
      %624 = vmatmul.f32.gmra.mxu0 %v473
      %v625 = vpop.f32.mrf.mxu0
      %v626 = vadd.f32 %v579, %v625
      %627 = vmatmul.f32.gmra.mxu0 %v474
      %v628 = vpop.f32.mrf.mxu0
      %v629 = vadd.f32 %v579, %v628
      %630 = vmatmul.f32.gmra.mxu0 %v475
      %v631 = vpop.f32.mrf.mxu0
      %v632 = vadd.f32 %v579, %v631
      %633 = vmatmul.f32.gmra.mxu0 %v476
      %v634 = vpop.f32.mrf.mxu0
      %v635 = vadd.f32 %v579, %v634
      %636 = vmatmul.f32.gmra.mxu0 %v477
      %v637 = vpop.f32.mrf.mxu0
      %v638 = vadd.f32 %v579, %v637
      %639 = vmatmul.f32.gmra.mxu0 %v478
      %v640 = vpop.f32.mrf.mxu0
      %v641 = vadd.f32 %v579, %v640
      %642 = vmatmul.f32.gmra.mxu0 %v479
      %v643 = vpop.f32.mrf.mxu0
      %v644 = vadd.f32 %v579, %v643
      %645 = vdwg.mxu0
      %646 = vmatpush.msra.mxu0 %v560
      %647 = vmatpush.msra.mxu0 %v559
      %648 = vmatpush.msra.mxu0 %v558
      %649 = vmatpush.msra.mxu0 %v557
      %650 = vmatpush.msra.mxu0 %v556
      %651 = vmatpush.msra.mxu0 %v555
      %652 = vmatpush.msra.mxu0 %v554
      %653 = vmatpush.msra.mxu0 %v553
      %654 = vmatpush.msra.mxu0 %v552
      %655 = vmatpush.msra.mxu0 %v551
      %656 = vmatpush.msra.mxu0 %v550
      %657 = vmatpush.msra.mxu0 %v549
      %658 = vmatpush.msra.mxu0 %v548
      %659 = vmatpush.msra.mxu0 %v547
      %660 = vmatpush.msra.mxu0 %v546
      %661 = vmatpush.msra.mxu0 %v545
      %662 = vmatmul.f32.gmra.mxu0 %v415
      %v663 = vpop.f32.mrf.mxu0
      %v664 = vadd.f32 %v599, %v663
      %665 = vmatmul.f32.gmra.mxu0 %v416
      %v666 = vpop.f32.mrf.mxu0
      %v667 = vadd.f32 %v602, %v666
      %668 = vmatmul.f32.gmra.mxu0 %v417
      %v669 = vpop.f32.mrf.mxu0
      %v670 = vadd.f32 %v605, %v669
      %671 = vmatmul.f32.gmra.mxu0 %v418
      %v672 = vpop.f32.mrf.mxu0
      %v673 = vadd.f32 %v608, %v672
      %674 = vmatmul.f32.gmra.mxu0 %v419
      %v675 = vpop.f32.mrf.mxu0
      %v676 = vadd.f32 %v611, %v675
      %677 = vmatmul.f32.gmra.mxu0 %v420
      %v678 = vpop.f32.mrf.mxu0
      %v679 = vadd.f32 %v614, %v678
      %680 = vmatmul.f32.gmra.mxu0 %v421
      %v681 = vpop.f32.mrf.mxu0
      %v682 = vadd.f32 %v617, %v681
      %683 = vmatmul.f32.gmra.mxu0 %v422
      %v684 = vpop.f32.mrf.mxu0
      %v685 = vadd.f32 %v620, %v684
      %686 = vmatmul.f32.gmra.mxu0 %v423
      %v687 = vpop.f32.mrf.mxu0
      %v688 = vadd.f32 %v623, %v687
      %689 = vmatmul.f32.gmra.mxu0 %v424
      %v690 = vpop.f32.mrf.mxu0
      %v691 = vadd.f32 %v626, %v690
      %692 = vmatmul.f32.gmra.mxu0 %v425
      %v693 = vpop.f32.mrf.mxu0
      %v694 = vadd.f32 %v629, %v693
      %695 = vmatmul.f32.gmra.mxu0 %v426
      %v696 = vpop.f32.mrf.mxu0
      %v697 = vadd.f32 %v632, %v696
      %698 = vmatmul.f32.gmra.mxu0 %v427
      %v699 = vpop.f32.mrf.mxu0
      %v700 = vadd.f32 %v635, %v699
      %701 = vmatmul.f32.gmra.mxu0 %v428
      %v702 = vpop.f32.mrf.mxu0
      %v703 = vadd.f32 %v638, %v702
      %704 = vmatmul.f32.gmra.mxu0 %v429
      %v705 = vpop.f32.mrf.mxu0
      %v706 = vadd.f32 %v641, %v705
      %707 = vmatmul.f32.gmra.mxu0 %v430
      %v708 = vpop.f32.mrf.mxu0
      %v709 = vadd.f32 %v644, %v708
      %710 = vdwg.mxu0
      %711 = vmatpush.msra.mxu0 %v576
      %712 = vmatpush.msra.mxu0 %v575
      %713 = vmatpush.msra.mxu0 %v574
      %714 = vmatpush.msra.mxu0 %v573
      %715 = vmatpush.msra.mxu0 %v572
      %716 = vmatpush.msra.mxu0 %v571
      %717 = vmatpush.msra.mxu0 %v570
      %718 = vmatpush.msra.mxu0 %v569
      %719 = vmatpush.msra.mxu0 %v568
      %720 = vmatpush.msra.mxu0 %v567
      %721 = vmatpush.msra.mxu0 %v566
      %722 = vmatpush.msra.mxu0 %v565
      %723 = vmatpush.msra.mxu0 %v564
      %724 = vmatpush.msra.mxu0 %v563
      %725 = vmatpush.msra.mxu0 %v562
      %726 = vmatpush.msra.mxu0 %v561
      %727 = vmatmul.f32.gmra.mxu0 %v513
      %v728 = vpop.f32.mrf.mxu0
      %v729 = vadd.f32 %v664, %v728
      %730 = vmatmul.f32.gmra.mxu0 %v514
      %v731 = vpop.f32.mrf.mxu0
      %v732 = vadd.f32 %v667, %v731
      %733 = vmatmul.f32.gmra.mxu0 %v515
      %v734 = vpop.f32.mrf.mxu0
      %v735 = vadd.f32 %v670, %v734
      %736 = vmatmul.f32.gmra.mxu0 %v516
      %v737 = vpop.f32.mrf.mxu0
      %v738 = vadd.f32 %v673, %v737
      %739 = vmatmul.f32.gmra.mxu0 %v517
      %v740 = vpop.f32.mrf.mxu0
      %v741 = vadd.f32 %v676, %v740
      %742 = vmatmul.f32.gmra.mxu0 %v518
      %v743 = vpop.f32.mrf.mxu0
      %v744 = vadd.f32 %v679, %v743
      %745 = vmatmul.f32.gmra.mxu0 %v519
      %v746 = vpop.f32.mrf.mxu0
      %v747 = vadd.f32 %v682, %v746
      %748 = vmatmul.f32.gmra.mxu0 %v520
      %v749 = vpop.f32.mrf.mxu0
      %v750 = vadd.f32 %v685, %v749
      %751 = vmatmul.f32.gmra.mxu0 %v521
      %v752 = vpop.f32.mrf.mxu0
      %v753 = vadd.f32 %v688, %v752
      %754 = vmatmul.f32.gmra.mxu0 %v522
      %v755 = vpop.f32.mrf.mxu0
      %v756 = vadd.f32 %v691, %v755
      %757 = vmatmul.f32.gmra.mxu0 %v523
      %v758 = vpop.f32.mrf.mxu0
      %v759 = vadd.f32 %v694, %v758
      %760 = vmatmul.f32.gmra.mxu0 %v524
      %v761 = vpop.f32.mrf.mxu0
      %v762 = vadd.f32 %v697, %v761
      %763 = vmatmul.f32.gmra.mxu0 %v525
      %v764 = vpop.f32.mrf.mxu0
      %v765 = vadd.f32 %v700, %v764
      %766 = vmatmul.f32.gmra.mxu0 %v526
      %v767 = vpop.f32.mrf.mxu0
      %v768 = vadd.f32 %v703, %v767
      %769 = vmatmul.f32.gmra.mxu0 %v527
      %v770 = vpop.f32.mrf.mxu0
      %v771 = vadd.f32 %v706, %v770
      %772 = vmatmul.f32.gmra.mxu0 %v528
      %v773 = vpop.f32.mrf.mxu0
      %v774 = vadd.f32 %v709, %v773
      %775 = vdwg.mxu0
      %v776 = vmax.f32 %v729, 0.0
      %v777 = vmax.f32 %v732, 0.0
      %v778 = vmax.f32 %v735, 0.0
      %v779 = vmax.f32 %v738, 0.0
      %v780 = vmax.f32 %v741, 0.0
      %v781 = vmax.f32 %v744, 0.0
      %v782 = vmax.f32 %v747, 0.0
      %v783 = vmax.f32 %v750, 0.0
      %v784 = vmax.f32 %v753, 0.0
      %v785 = vmax.f32 %v756, 0.0
      %v786 = vmax.f32 %v759, 0.0
      %v787 = vmax.f32 %v762, 0.0
      %v788 = vmax.f32 %v765, 0.0
      %v789 = vmax.f32 %v768, 0.0
      %v790 = vmax.f32 %v771, 0.0
      %v791 = vmax.f32 %v774, 0.0
      %v792 = vrot.slane %v776, 7
      %v793 = vrot.slane %v777, 7
      %v794 = vrot.slane %v778, 7
      %v795 = vrot.slane %v779, 7
      %v796 = vrot.slane %v780, 7
      %v797 = vrot.slane %v781, 7
      %v798 = vrot.slane %v782, 7
      %v799 = vrot.slane %v783, 7
      %v800 = vrot.slane %v784, 7
      %v801 = vrot.slane %v785, 7
      %v802 = vrot.slane %v786, 7
      %v803 = vrot.slane %v787, 7
      %v804 = vrot.slane %v788, 7
      %v805 = vrot.slane %v789, 7
      %v806 = vrot.slane %v790, 7
      %v807 = vrot.slane %v791, 7
      %v808 = vsel %vm447, %v806, %v807
      %v809 = vsel %vm447, %v805, %v806
      %v810 = vsel %vm447, %v804, %v805
      %v811 = vsel %vm447, %v803, %v804
      %v812 = vsel %vm447, %v802, %v803
      %v813 = vsel %vm447, %v801, %v802
      %v814 = vsel %vm447, %v800, %v801
      %v815 = vsel %vm447, %v799, %v800
      %v816 = vsel %vm447, %v798, %v799
      %v817 = vsel %vm447, %v797, %v798
      %v818 = vsel %vm447, %v796, %v797
      %v819 = vsel %vm447, %v795, %v796
      %v820 = vsel %vm447, %v794, %v795
      %v821 = vsel %vm447, %v793, %v794
      %v822 = vsel %vm447, %v792, %v793
      %v823 = vsel %vm447, %v807, %v792
      %v824 = vsel %vm383, 0.0, %v823
      %v825 = vsel %vm384, 0.0, %v822
      %v826 = vsel %vm385, 0.0, %v821
      %v827 = vsel %vm386, 0.0, %v820
      %v828 = vsel %vm387, 0.0, %v819
      %v829 = vsel %vm388, 0.0, %v818
      %v830 = vsel %vm389, 0.0, %v817
      %v831 = vsel %vm390, 0.0, %v816
      %v832 = vsel %vm391, 0.0, %v815
      %v833 = vsel %vm392, 0.0, %v814
      %v834 = vsel %vm393, 0.0, %v813
      %v835 = vsel %vm394, 0.0, %v812
      %v836 = vsel %vm395, 0.0, %v811
      %v837 = vsel %vm396, 0.0, %v810
      %v838 = vsel %vm397, 0.0, %v809
      %v839 = vsel %vm398, 0.0, %v808
      %v840 = vrot.slane %v776, 1
      %v841 = vrot.slane %v777, 1
      %v842 = vrot.slane %v778, 1
      %v843 = vrot.slane %v779, 1
      %v844 = vrot.slane %v780, 1
      %v845 = vrot.slane %v781, 1
      %v846 = vrot.slane %v782, 1
      %v847 = vrot.slane %v783, 1
      %v848 = vrot.slane %v784, 1
      %v849 = vrot.slane %v785, 1
      %v850 = vrot.slane %v786, 1
      %v851 = vrot.slane %v787, 1
      %v852 = vrot.slane %v788, 1
      %v853 = vrot.slane %v789, 1
      %v854 = vrot.slane %v790, 1
      %v855 = vrot.slane %v791, 1
      %v856 = vsel %vm496, %v854, %v855
      %v857 = vsel %vm496, %v853, %v854
      %v858 = vsel %vm496, %v852, %v853
      %v859 = vsel %vm496, %v851, %v852
      %v860 = vsel %vm496, %v850, %v851
      %v861 = vsel %vm496, %v849, %v850
      %v862 = vsel %vm496, %v848, %v849
      %v863 = vsel %vm496, %v847, %v848
      %v864 = vsel %vm496, %v846, %v847
      %v865 = vsel %vm496, %v845, %v846
      %v866 = vsel %vm496, %v844, %v845
      %v867 = vsel %vm496, %v843, %v844
      %v868 = vsel %vm496, %v842, %v843
      %v869 = vsel %vm496, %v841, %v842
      %v870 = vsel %vm496, %v840, %v841
      %v871 = vsel %vm496, %v855, %v840
      %v872 = vsel %vm399, 0.0, %v870
      %v873 = vsel %vm400, 0.0, %v869
      %v874 = vsel %vm401, 0.0, %v868
      %v875 = vsel %vm402, 0.0, %v867
      %v876 = vsel %vm403, 0.0, %v866
      %v877 = vsel %vm404, 0.0, %v865
      %v878 = vsel %vm405, 0.0, %v864
      %v879 = vsel %vm406, 0.0, %v863
      %v880 = vsel %vm407, 0.0, %v862
      %v881 = vsel %vm408, 0.0, %v861
      %v882 = vsel %vm409, 0.0, %v860
      %v883 = vsel %vm410, 0.0, %v859
      %v884 = vsel %vm411, 0.0, %v858
      %v885 = vsel %vm412, 0.0, %v857
      %v886 = vsel %vm413, 0.0, %v856
      %v887 = vsel %vm414, 0.0, %v871
      %s888 = scalar_lea.vmem %s1, 384
      %v889 = vld [vmem:[%s888] sm:$0xff]
      %v890 = vld [vmem:[%s888 + $0x8] sm:$0xff]
      %v891 = vld [vmem:[%s888 + $0x10] sm:$0xff]
      %v892 = vld [vmem:[%s888 + $0x18] sm:$0xff]
      %v893 = vld [vmem:[%s888 + $0x20] sm:$0xff]
      %v894 = vld [vmem:[%s888 + $0x28] sm:$0xff]
      %v895 = vld [vmem:[%s888 + $0x30] sm:$0xff]
      %v896 = vld [vmem:[%s888 + $0x38] sm:$0xff]
      %v897 = vld [vmem:[%s888 + $0x40] sm:$0xff]
      %v898 = vld [vmem:[%s888 + $0x48] sm:$0xff]
      %v899 = vld [vmem:[%s888 + $0x50] sm:$0xff]
      %v900 = vld [vmem:[%s888 + $0x58] sm:$0xff]
      %v901 = vld [vmem:[%s888 + $0x60] sm:$0xff]
      %v902 = vld [vmem:[%s888 + $0x68] sm:$0xff]
      %v903 = vld [vmem:[%s888 + $0x70] sm:$0xff]
      %v904 = vld [vmem:[%s888 + $0x78] sm:$0xff]
      %v905 = vld [vmem:[%s888 + $0x80] sm:$0xff]
      %v906 = vld [vmem:[%s888 + $0x88] sm:$0xff]
      %v907 = vld [vmem:[%s888 + $0x90] sm:$0xff]
      %v908 = vld [vmem:[%s888 + $0x98] sm:$0xff]
      %v909 = vld [vmem:[%s888 + $0xa0] sm:$0xff]
      %v910 = vld [vmem:[%s888 + $0xa8] sm:$0xff]
      %v911 = vld [vmem:[%s888 + $0xb0] sm:$0xff]
      %v912 = vld [vmem:[%s888 + $0xb8] sm:$0xff]
      %v913 = vld [vmem:[%s888 + $0xc0] sm:$0xff]
      %v914 = vld [vmem:[%s888 + $0xc8] sm:$0xff]
      %v915 = vld [vmem:[%s888 + $0xd0] sm:$0xff]
      %v916 = vld [vmem:[%s888 + $0xd8] sm:$0xff]
      %v917 = vld [vmem:[%s888 + $0xe0] sm:$0xff]
      %v918 = vld [vmem:[%s888 + $0xe8] sm:$0xff]
      %v919 = vld [vmem:[%s888 + $0xf0] sm:$0xff]
      %v920 = vld [vmem:[%s888 + $0xf8] sm:$0xff]
      %v921 = vld [vmem:[%s888 + $0x100] sm:$0xff]
      %v922 = vld [vmem:[%s888 + $0x108] sm:$0xff]
      %v923 = vld [vmem:[%s888 + $0x110] sm:$0xff]
      %v924 = vld [vmem:[%s888 + $0x118] sm:$0xff]
      %v925 = vld [vmem:[%s888 + $0x120] sm:$0xff]
      %v926 = vld [vmem:[%s888 + $0x128] sm:$0xff]
      %v927 = vld [vmem:[%s888 + $0x130] sm:$0xff]
      %v928 = vld [vmem:[%s888 + $0x138] sm:$0xff]
      %v929 = vld [vmem:[%s888 + $0x140] sm:$0xff]
      %v930 = vld [vmem:[%s888 + $0x148] sm:$0xff]
      %v931 = vld [vmem:[%s888 + $0x150] sm:$0xff]
      %v932 = vld [vmem:[%s888 + $0x158] sm:$0xff]
      %v933 = vld [vmem:[%s888 + $0x160] sm:$0xff]
      %v934 = vld [vmem:[%s888 + $0x168] sm:$0xff]
      %v935 = vld [vmem:[%s888 + $0x170] sm:$0xff]
      %v936 = vld [vmem:[%s888 + $0x178] sm:$0xff]
      %s937 = scalar_lea.vmem %s2, 1
      %v938 = vld [vmem:[%s937] sm:$0x1]
      %v940 = vperm.slane %v938, 0
      %942 = vmatpush.msra.mxu0 %v904
      %943 = vmatpush.msra.mxu0 %v903
      %944 = vmatpush.msra.mxu0 %v902
      %945 = vmatpush.msra.mxu0 %v901
      %946 = vmatpush.msra.mxu0 %v900
      %947 = vmatpush.msra.mxu0 %v899
      %948 = vmatpush.msra.mxu0 %v898
      %949 = vmatpush.msra.mxu0 %v897
      %950 = vmatpush.msra.mxu0 %v896
      %951 = vmatpush.msra.mxu0 %v895
      %952 = vmatpush.msra.mxu0 %v894
      %953 = vmatpush.msra.mxu0 %v893
      %954 = vmatpush.msra.mxu0 %v892
      %955 = vmatpush.msra.mxu0 %v891
      %956 = vmatpush.msra.mxu0 %v890
      %957 = vmatpush.msra.mxu0 %v889
      %958 = vmatmul.f32.gmra.mxu0 %v824
      %v959 = vpop.f32.mrf.mxu0
      %v960 = vadd.f32 %v940, %v959
      %961 = vmatmul.f32.gmra.mxu0 %v825
      %v962 = vpop.f32.mrf.mxu0
      %v963 = vadd.f32 %v940, %v962
      %964 = vmatmul.f32.gmra.mxu0 %v826
      %v965 = vpop.f32.mrf.mxu0
      %v966 = vadd.f32 %v940, %v965
      %967 = vmatmul.f32.gmra.mxu0 %v827
      %v968 = vpop.f32.mrf.mxu0
      %v969 = vadd.f32 %v940, %v968
      %970 = vmatmul.f32.gmra.mxu0 %v828
      %v971 = vpop.f32.mrf.mxu0
      %v972 = vadd.f32 %v940, %v971
      %973 = vmatmul.f32.gmra.mxu0 %v829
      %v974 = vpop.f32.mrf.mxu0
      %v975 = vadd.f32 %v940, %v974
      %976 = vmatmul.f32.gmra.mxu0 %v830
      %v977 = vpop.f32.mrf.mxu0
      %v978 = vadd.f32 %v940, %v977
      %979 = vmatmul.f32.gmra.mxu0 %v831
      %v980 = vpop.f32.mrf.mxu0
      %v981 = vadd.f32 %v940, %v980
      %982 = vmatmul.f32.gmra.mxu0 %v832
      %v983 = vpop.f32.mrf.mxu0
      %v984 = vadd.f32 %v940, %v983
      %985 = vmatmul.f32.gmra.mxu0 %v833
      %v986 = vpop.f32.mrf.mxu0
      %v987 = vadd.f32 %v940, %v986
      %988 = vmatmul.f32.gmra.mxu0 %v834
      %v989 = vpop.f32.mrf.mxu0
      %v990 = vadd.f32 %v940, %v989
      %991 = vmatmul.f32.gmra.mxu0 %v835
      %v992 = vpop.f32.mrf.mxu0
      %v993 = vadd.f32 %v940, %v992
      %994 = vmatmul.f32.gmra.mxu0 %v836
      %v995 = vpop.f32.mrf.mxu0
      %v996 = vadd.f32 %v940, %v995
      %997 = vmatmul.f32.gmra.mxu0 %v837
      %v998 = vpop.f32.mrf.mxu0
      %v999 = vadd.f32 %v940, %v998
      %1000 = vmatmul.f32.gmra.mxu0 %v838
      %v1001 = vpop.f32.mrf.mxu0
      %v1002 = vadd.f32 %v940, %v1001
      %1003 = vmatmul.f32.gmra.mxu0 %v839
      %v1004 = vpop.f32.mrf.mxu0
      %v1005 = vadd.f32 %v940, %v1004
      %1006 = vdwg.mxu0
      %1007 = vmatpush.msra.mxu0 %v920
      %1008 = vmatpush.msra.mxu0 %v919
      %1009 = vmatpush.msra.mxu0 %v918
      %1010 = vmatpush.msra.mxu0 %v917
      %1011 = vmatpush.msra.mxu0 %v916
      %1012 = vmatpush.msra.mxu0 %v915
      %1013 = vmatpush.msra.mxu0 %v914
      %1014 = vmatpush.msra.mxu0 %v913
      %1015 = vmatpush.msra.mxu0 %v912
      %1016 = vmatpush.msra.mxu0 %v911
      %1017 = vmatpush.msra.mxu0 %v910
      %1018 = vmatpush.msra.mxu0 %v909
      %1019 = vmatpush.msra.mxu0 %v908
      %1020 = vmatpush.msra.mxu0 %v907
      %1021 = vmatpush.msra.mxu0 %v906
      %1022 = vmatpush.msra.mxu0 %v905
      %1023 = vmatmul.f32.gmra.mxu0 %v776
      %v1024 = vpop.f32.mrf.mxu0
      %v1025 = vadd.f32 %v960, %v1024
      %1026 = vmatmul.f32.gmra.mxu0 %v777
      %v1027 = vpop.f32.mrf.mxu0
      %v1028 = vadd.f32 %v963, %v1027
      %1029 = vmatmul.f32.gmra.mxu0 %v778
      %v1030 = vpop.f32.mrf.mxu0
      %v1031 = vadd.f32 %v966, %v1030
      %1032 = vmatmul.f32.gmra.mxu0 %v779
      %v1033 = vpop.f32.mrf.mxu0
      %v1034 = vadd.f32 %v969, %v1033
      %1035 = vmatmul.f32.gmra.mxu0 %v780
      %v1036 = vpop.f32.mrf.mxu0
      %v1037 = vadd.f32 %v972, %v1036
      %1038 = vmatmul.f32.gmra.mxu0 %v781
      %v1039 = vpop.f32.mrf.mxu0
      %v1040 = vadd.f32 %v975, %v1039
      %1041 = vmatmul.f32.gmra.mxu0 %v782
      %v1042 = vpop.f32.mrf.mxu0
      %v1043 = vadd.f32 %v978, %v1042
      %1044 = vmatmul.f32.gmra.mxu0 %v783
      %v1045 = vpop.f32.mrf.mxu0
      %v1046 = vadd.f32 %v981, %v1045
      %1047 = vmatmul.f32.gmra.mxu0 %v784
      %v1048 = vpop.f32.mrf.mxu0
      %v1049 = vadd.f32 %v984, %v1048
      %1050 = vmatmul.f32.gmra.mxu0 %v785
      %v1051 = vpop.f32.mrf.mxu0
      %v1052 = vadd.f32 %v987, %v1051
      %1053 = vmatmul.f32.gmra.mxu0 %v786
      %v1054 = vpop.f32.mrf.mxu0
      %v1055 = vadd.f32 %v990, %v1054
      %1056 = vmatmul.f32.gmra.mxu0 %v787
      %v1057 = vpop.f32.mrf.mxu0
      %v1058 = vadd.f32 %v993, %v1057
      %1059 = vmatmul.f32.gmra.mxu0 %v788
      %v1060 = vpop.f32.mrf.mxu0
      %v1061 = vadd.f32 %v996, %v1060
      %1062 = vmatmul.f32.gmra.mxu0 %v789
      %v1063 = vpop.f32.mrf.mxu0
      %v1064 = vadd.f32 %v999, %v1063
      %1065 = vmatmul.f32.gmra.mxu0 %v790
      %v1066 = vpop.f32.mrf.mxu0
      %v1067 = vadd.f32 %v1002, %v1066
      %1068 = vmatmul.f32.gmra.mxu0 %v791
      %v1069 = vpop.f32.mrf.mxu0
      %v1070 = vadd.f32 %v1005, %v1069
      %1071 = vdwg.mxu0
      %1072 = vmatpush.msra.mxu0 %v936
      %1073 = vmatpush.msra.mxu0 %v935
      %1074 = vmatpush.msra.mxu0 %v934
      %1075 = vmatpush.msra.mxu0 %v933
      %1076 = vmatpush.msra.mxu0 %v932
      %1077 = vmatpush.msra.mxu0 %v931
      %1078 = vmatpush.msra.mxu0 %v930
      %1079 = vmatpush.msra.mxu0 %v929
      %1080 = vmatpush.msra.mxu0 %v928
      %1081 = vmatpush.msra.mxu0 %v927
      %1082 = vmatpush.msra.mxu0 %v926
      %1083 = vmatpush.msra.mxu0 %v925
      %1084 = vmatpush.msra.mxu0 %v924
      %1085 = vmatpush.msra.mxu0 %v923
      %1086 = vmatpush.msra.mxu0 %v922
      %1087 = vmatpush.msra.mxu0 %v921
      %1088 = vmatmul.f32.gmra.mxu0 %v872
      %v1089 = vpop.f32.mrf.mxu0
      %v1090 = vadd.f32 %v1025, %v1089
      %1091 = vmatmul.f32.gmra.mxu0 %v873
      %v1092 = vpop.f32.mrf.mxu0
      %v1093 = vadd.f32 %v1028, %v1092
      %1094 = vmatmul.f32.gmra.mxu0 %v874
      %v1095 = vpop.f32.mrf.mxu0
      %v1096 = vadd.f32 %v1031, %v1095
      %1097 = vmatmul.f32.gmra.mxu0 %v875
      %v1098 = vpop.f32.mrf.mxu0
      %v1099 = vadd.f32 %v1034, %v1098
      %1100 = vmatmul.f32.gmra.mxu0 %v876
      %v1101 = vpop.f32.mrf.mxu0
      %v1102 = vadd.f32 %v1037, %v1101
      %1103 = vmatmul.f32.gmra.mxu0 %v877
      %v1104 = vpop.f32.mrf.mxu0
      %v1105 = vadd.f32 %v1040, %v1104
      %1106 = vmatmul.f32.gmra.mxu0 %v878
      %v1107 = vpop.f32.mrf.mxu0
      %v1108 = vadd.f32 %v1043, %v1107
      %1109 = vmatmul.f32.gmra.mxu0 %v879
      %v1110 = vpop.f32.mrf.mxu0
      %v1111 = vadd.f32 %v1046, %v1110
      %1112 = vmatmul.f32.gmra.mxu0 %v880
      %v1113 = vpop.f32.mrf.mxu0
      %v1114 = vadd.f32 %v1049, %v1113
      %1115 = vmatmul.f32.gmra.mxu0 %v881
      %v1116 = vpop.f32.mrf.mxu0
      %v1117 = vadd.f32 %v1052, %v1116
      %1118 = vmatmul.f32.gmra.mxu0 %v882
      %v1119 = vpop.f32.mrf.mxu0
      %v1120 = vadd.f32 %v1055, %v1119
      %1121 = vmatmul.f32.gmra.mxu0 %v883
      %v1122 = vpop.f32.mrf.mxu0
      %v1123 = vadd.f32 %v1058, %v1122
      %1124 = vmatmul.f32.gmra.mxu0 %v884
      %v1125 = vpop.f32.mrf.mxu0
      %v1126 = vadd.f32 %v1061, %v1125
      %1127 = vmatmul.f32.gmra.mxu0 %v885
      %v1128 = vpop.f32.mrf.mxu0
      %v1129 = vadd.f32 %v1064, %v1128
      %1130 = vmatmul.f32.gmra.mxu0 %v886
      %v1131 = vpop.f32.mrf.mxu0
      %v1132 = vadd.f32 %v1067, %v1131
      %1133 = vmatmul.f32.gmra.mxu0 %v887
      %v1134 = vpop.f32.mrf.mxu0
      %v1135 = vadd.f32 %v1070, %v1134
      %1136 = vdwg.mxu0
      %v1137 = vadd.f32 %v415, %v1090
      %v1138 = vadd.f32 %v416, %v1093
      %v1139 = vadd.f32 %v417, %v1096
      %v1140 = vadd.f32 %v418, %v1099
      %v1141 = vadd.f32 %v419, %v1102
      %v1142 = vadd.f32 %v420, %v1105
      %v1143 = vadd.f32 %v421, %v1108
      %v1144 = vadd.f32 %v422, %v1111
      %v1145 = vadd.f32 %v423, %v1114
      %v1146 = vadd.f32 %v424, %v1117
      %v1147 = vadd.f32 %v425, %v1120
      %v1148 = vadd.f32 %v426, %v1123
      %v1149 = vadd.f32 %v427, %v1126
      %v1150 = vadd.f32 %v428, %v1129
      %v1151 = vadd.f32 %v429, %v1132
      %v1152 = vadd.f32 %v430, %v1135
      %v1153 = vrot.slane %v1137, 7
      %v1154 = vrot.slane %v1138, 7
      %v1155 = vrot.slane %v1139, 7
      %v1156 = vrot.slane %v1140, 7
      %v1157 = vrot.slane %v1141, 7
      %v1158 = vrot.slane %v1142, 7
      %v1159 = vrot.slane %v1143, 7
      %v1160 = vrot.slane %v1144, 7
      %v1161 = vrot.slane %v1145, 7
      %v1162 = vrot.slane %v1146, 7
      %v1163 = vrot.slane %v1147, 7
      %v1164 = vrot.slane %v1148, 7
      %v1165 = vrot.slane %v1149, 7
      %v1166 = vrot.slane %v1150, 7
      %v1167 = vrot.slane %v1151, 7
      %v1168 = vrot.slane %v1152, 7
      %v1169 = vsel %vm447, %v1167, %v1168
      %v1170 = vsel %vm447, %v1166, %v1167
      %v1171 = vsel %vm447, %v1165, %v1166
      %v1172 = vsel %vm447, %v1164, %v1165
      %v1173 = vsel %vm447, %v1163, %v1164
      %v1174 = vsel %vm447, %v1162, %v1163
      %v1175 = vsel %vm447, %v1161, %v1162
      %v1176 = vsel %vm447, %v1160, %v1161
      %v1177 = vsel %vm447, %v1159, %v1160
      %v1178 = vsel %vm447, %v1158, %v1159
      %v1179 = vsel %vm447, %v1157, %v1158
      %v1180 = vsel %vm447, %v1156, %v1157
      %v1181 = vsel %vm447, %v1155, %v1156
      %v1182 = vsel %vm447, %v1154, %v1155
      %v1183 = vsel %vm447, %v1153, %v1154
      %v1184 = vsel %vm447, %v1168, %v1153
      %v1185 = vsel %vm383, 0.0, %v1184
      %v1186 = vsel %vm384, 0.0, %v1183
      %v1187 = vsel %vm385, 0.0, %v1182
      %v1188 = vsel %vm386, 0.0, %v1181
      %v1189 = vsel %vm387, 0.0, %v1180
      %v1190 = vsel %vm388, 0.0, %v1179
      %v1191 = vsel %vm389, 0.0, %v1178
      %v1192 = vsel %vm390, 0.0, %v1177
      %v1193 = vsel %vm391, 0.0, %v1176
      %v1194 = vsel %vm392, 0.0, %v1175
      %v1195 = vsel %vm393, 0.0, %v1174
      %v1196 = vsel %vm394, 0.0, %v1173
      %v1197 = vsel %vm395, 0.0, %v1172
      %v1198 = vsel %vm396, 0.0, %v1171
      %v1199 = vsel %vm397, 0.0, %v1170
      %v1200 = vsel %vm398, 0.0, %v1169
      %v1201 = vrot.slane %v1137, 1
      %v1202 = vrot.slane %v1138, 1
      %v1203 = vrot.slane %v1139, 1
      %v1204 = vrot.slane %v1140, 1
      %v1205 = vrot.slane %v1141, 1
      %v1206 = vrot.slane %v1142, 1
      %v1207 = vrot.slane %v1143, 1
      %v1208 = vrot.slane %v1144, 1
      %v1209 = vrot.slane %v1145, 1
      %v1210 = vrot.slane %v1146, 1
      %v1211 = vrot.slane %v1147, 1
      %v1212 = vrot.slane %v1148, 1
      %v1213 = vrot.slane %v1149, 1
      %v1214 = vrot.slane %v1150, 1
      %v1215 = vrot.slane %v1151, 1
      %v1216 = vrot.slane %v1152, 1
      %v1217 = vsel %vm496, %v1215, %v1216
      %v1218 = vsel %vm496, %v1214, %v1215
      %v1219 = vsel %vm496, %v1213, %v1214
      %v1220 = vsel %vm496, %v1212, %v1213
      %v1221 = vsel %vm496, %v1211, %v1212
      %v1222 = vsel %vm496, %v1210, %v1211
      %v1223 = vsel %vm496, %v1209, %v1210
      %v1224 = vsel %vm496, %v1208, %v1209
      %v1225 = vsel %vm496, %v1207, %v1208
      %v1226 = vsel %vm496, %v1206, %v1207
      %v1227 = vsel %vm496, %v1205, %v1206
      %v1228 = vsel %vm496, %v1204, %v1205
      %v1229 = vsel %vm496, %v1203, %v1204
      %v1230 = vsel %vm496, %v1202, %v1203
      %v1231 = vsel %vm496, %v1201, %v1202
      %v1232 = vsel %vm496, %v1216, %v1201
      %v1233 = vsel %vm399, 0.0, %v1231
      %v1234 = vsel %vm400, 0.0, %v1230
      %v1235 = vsel %vm401, 0.0, %v1229
      %v1236 = vsel %vm402, 0.0, %v1228
      %v1237 = vsel %vm403, 0.0, %v1227
      %v1238 = vsel %vm404, 0.0, %v1226
      %v1239 = vsel %vm405, 0.0, %v1225
      %v1240 = vsel %vm406, 0.0, %v1224
      %v1241 = vsel %vm407, 0.0, %v1223
      %v1242 = vsel %vm408, 0.0, %v1222
      %v1243 = vsel %vm409, 0.0, %v1221
      %v1244 = vsel %vm410, 0.0, %v1220
      %v1245 = vsel %vm411, 0.0, %v1219
      %v1246 = vsel %vm412, 0.0, %v1218
      %v1247 = vsel %vm413, 0.0, %v1217
      %v1248 = vsel %vm414, 0.0, %v1232
      %s1249 = scalar_lea.vmem %s1, 768
      %v1250 = vld [vmem:[%s1249] sm:$0xff]
      %v1251 = vld [vmem:[%s1249 + $0x8] sm:$0xff]
      %v1252 = vld [vmem:[%s1249 + $0x10] sm:$0xff]
      %v1253 = vld [vmem:[%s1249 + $0x18] sm:$0xff]
      %v1254 = vld [vmem:[%s1249 + $0x20] sm:$0xff]
      %v1255 = vld [vmem:[%s1249 + $0x28] sm:$0xff]
      %v1256 = vld [vmem:[%s1249 + $0x30] sm:$0xff]
      %v1257 = vld [vmem:[%s1249 + $0x38] sm:$0xff]
      %v1258 = vld [vmem:[%s1249 + $0x40] sm:$0xff]
      %v1259 = vld [vmem:[%s1249 + $0x48] sm:$0xff]
      %v1260 = vld [vmem:[%s1249 + $0x50] sm:$0xff]
      %v1261 = vld [vmem:[%s1249 + $0x58] sm:$0xff]
      %v1262 = vld [vmem:[%s1249 + $0x60] sm:$0xff]
      %v1263 = vld [vmem:[%s1249 + $0x68] sm:$0xff]
      %v1264 = vld [vmem:[%s1249 + $0x70] sm:$0xff]
      %v1265 = vld [vmem:[%s1249 + $0x78] sm:$0xff]
      %v1266 = vld [vmem:[%s1249 + $0x80] sm:$0xff]
      %v1267 = vld [vmem:[%s1249 + $0x88] sm:$0xff]
      %v1268 = vld [vmem:[%s1249 + $0x90] sm:$0xff]
      %v1269 = vld [vmem:[%s1249 + $0x98] sm:$0xff]
      %v1270 = vld [vmem:[%s1249 + $0xa0] sm:$0xff]
      %v1271 = vld [vmem:[%s1249 + $0xa8] sm:$0xff]
      %v1272 = vld [vmem:[%s1249 + $0xb0] sm:$0xff]
      %v1273 = vld [vmem:[%s1249 + $0xb8] sm:$0xff]
      %v1274 = vld [vmem:[%s1249 + $0xc0] sm:$0xff]
      %v1275 = vld [vmem:[%s1249 + $0xc8] sm:$0xff]
      %v1276 = vld [vmem:[%s1249 + $0xd0] sm:$0xff]
      %v1277 = vld [vmem:[%s1249 + $0xd8] sm:$0xff]
      %v1278 = vld [vmem:[%s1249 + $0xe0] sm:$0xff]
      %v1279 = vld [vmem:[%s1249 + $0xe8] sm:$0xff]
      %v1280 = vld [vmem:[%s1249 + $0xf0] sm:$0xff]
      %v1281 = vld [vmem:[%s1249 + $0xf8] sm:$0xff]
      %v1282 = vld [vmem:[%s1249 + $0x100] sm:$0xff]
      %v1283 = vld [vmem:[%s1249 + $0x108] sm:$0xff]
      %v1284 = vld [vmem:[%s1249 + $0x110] sm:$0xff]
      %v1285 = vld [vmem:[%s1249 + $0x118] sm:$0xff]
      %v1286 = vld [vmem:[%s1249 + $0x120] sm:$0xff]
      %v1287 = vld [vmem:[%s1249 + $0x128] sm:$0xff]
      %v1288 = vld [vmem:[%s1249 + $0x130] sm:$0xff]
      %v1289 = vld [vmem:[%s1249 + $0x138] sm:$0xff]
      %v1290 = vld [vmem:[%s1249 + $0x140] sm:$0xff]
      %v1291 = vld [vmem:[%s1249 + $0x148] sm:$0xff]
      %v1292 = vld [vmem:[%s1249 + $0x150] sm:$0xff]
      %v1293 = vld [vmem:[%s1249 + $0x158] sm:$0xff]
      %v1294 = vld [vmem:[%s1249 + $0x160] sm:$0xff]
      %v1295 = vld [vmem:[%s1249 + $0x168] sm:$0xff]
      %v1296 = vld [vmem:[%s1249 + $0x170] sm:$0xff]
      %v1297 = vld [vmem:[%s1249 + $0x178] sm:$0xff]
      %s1298 = scalar_lea.vmem %s2, 2
      %v1299 = vld [vmem:[%s1298] sm:$0x1]
      %v1301 = vperm.slane %v1299, 0
      %1303 = vmatpush.msra.mxu0 %v1265
      %1304 = vmatpush.msra.mxu0 %v1264
      %1305 = vmatpush.msra.mxu0 %v1263
      %1306 = vmatpush.msra.mxu0 %v1262
      %1307 = vmatpush.msra.mxu0 %v1261
      %1308 = vmatpush.msra.mxu0 %v1260
      %1309 = vmatpush.msra.mxu0 %v1259
      %1310 = vmatpush.msra.mxu0 %v1258
      %1311 = vmatpush.msra.mxu0 %v1257
      %1312 = vmatpush.msra.mxu0 %v1256
      %1313 = vmatpush.msra.mxu0 %v1255
      %1314 = vmatpush.msra.mxu0 %v1254
      %1315 = vmatpush.msra.mxu0 %v1253
      %1316 = vmatpush.msra.mxu0 %v1252
      %1317 = vmatpush.msra.mxu0 %v1251
      %1318 = vmatpush.msra.mxu0 %v1250
      %1319 = vmatmul.f32.gmra.mxu0 %v1185
      %v1320 = vpop.f32.mrf.mxu0
      %v1321 = vadd.f32 %v1301, %v1320
      %1322 = vmatmul.f32.gmra.mxu0 %v1186
      %v1323 = vpop.f32.mrf.mxu0
      %v1324 = vadd.f32 %v1301, %v1323
      %1325 = vmatmul.f32.gmra.mxu0 %v1187
      %v1326 = vpop.f32.mrf.mxu0
      %v1327 = vadd.f32 %v1301, %v1326
      %1328 = vmatmul.f32.gmra.mxu0 %v1188
      %v1329 = vpop.f32.mrf.mxu0
      %v1330 = vadd.f32 %v1301, %v1329
      %1331 = vmatmul.f32.gmra.mxu0 %v1189
      %v1332 = vpop.f32.mrf.mxu0
      %v1333 = vadd.f32 %v1301, %v1332
      %1334 = vmatmul.f32.gmra.mxu0 %v1190
      %v1335 = vpop.f32.mrf.mxu0
      %v1336 = vadd.f32 %v1301, %v1335
      %1337 = vmatmul.f32.gmra.mxu0 %v1191
      %v1338 = vpop.f32.mrf.mxu0
      %v1339 = vadd.f32 %v1301, %v1338
      %1340 = vmatmul.f32.gmra.mxu0 %v1192
      %v1341 = vpop.f32.mrf.mxu0
      %v1342 = vadd.f32 %v1301, %v1341
      %1343 = vmatmul.f32.gmra.mxu0 %v1193
      %v1344 = vpop.f32.mrf.mxu0
      %v1345 = vadd.f32 %v1301, %v1344
      %1346 = vmatmul.f32.gmra.mxu0 %v1194
      %v1347 = vpop.f32.mrf.mxu0
      %v1348 = vadd.f32 %v1301, %v1347
      %1349 = vmatmul.f32.gmra.mxu0 %v1195
      %v1350 = vpop.f32.mrf.mxu0
      %v1351 = vadd.f32 %v1301, %v1350
      %1352 = vmatmul.f32.gmra.mxu0 %v1196
      %v1353 = vpop.f32.mrf.mxu0
      %v1354 = vadd.f32 %v1301, %v1353
      %1355 = vmatmul.f32.gmra.mxu0 %v1197
      %v1356 = vpop.f32.mrf.mxu0
      %v1357 = vadd.f32 %v1301, %v1356
      %1358 = vmatmul.f32.gmra.mxu0 %v1198
      %v1359 = vpop.f32.mrf.mxu0
      %v1360 = vadd.f32 %v1301, %v1359
      %1361 = vmatmul.f32.gmra.mxu0 %v1199
      %v1362 = vpop.f32.mrf.mxu0
      %v1363 = vadd.f32 %v1301, %v1362
      %1364 = vmatmul.f32.gmra.mxu0 %v1200
      %v1365 = vpop.f32.mrf.mxu0
      %v1366 = vadd.f32 %v1301, %v1365
      %1367 = vdwg.mxu0
      %1368 = vmatpush.msra.mxu0 %v1281
      %1369 = vmatpush.msra.mxu0 %v1280
      %1370 = vmatpush.msra.mxu0 %v1279
      %1371 = vmatpush.msra.mxu0 %v1278
      %1372 = vmatpush.msra.mxu0 %v1277
      %1373 = vmatpush.msra.mxu0 %v1276
      %1374 = vmatpush.msra.mxu0 %v1275
      %1375 = vmatpush.msra.mxu0 %v1274
      %1376 = vmatpush.msra.mxu0 %v1273
      %1377 = vmatpush.msra.mxu0 %v1272
      %1378 = vmatpush.msra.mxu0 %v1271
      %1379 = vmatpush.msra.mxu0 %v1270
      %1380 = vmatpush.msra.mxu0 %v1269
      %1381 = vmatpush.msra.mxu0 %v1268
      %1382 = vmatpush.msra.mxu0 %v1267
      %1383 = vmatpush.msra.mxu0 %v1266
      %1384 = vmatmul.f32.gmra.mxu0 %v1137
      %v1385 = vpop.f32.mrf.mxu0
      %v1386 = vadd.f32 %v1321, %v1385
      %1387 = vmatmul.f32.gmra.mxu0 %v1138
      %v1388 = vpop.f32.mrf.mxu0
      %v1389 = vadd.f32 %v1324, %v1388
      %1390 = vmatmul.f32.gmra.mxu0 %v1139
      %v1391 = vpop.f32.mrf.mxu0
      %v1392 = vadd.f32 %v1327, %v1391
      %1393 = vmatmul.f32.gmra.mxu0 %v1140
      %v1394 = vpop.f32.mrf.mxu0
      %v1395 = vadd.f32 %v1330, %v1394
      %1396 = vmatmul.f32.gmra.mxu0 %v1141
      %v1397 = vpop.f32.mrf.mxu0
      %v1398 = vadd.f32 %v1333, %v1397
      %1399 = vmatmul.f32.gmra.mxu0 %v1142
      %v1400 = vpop.f32.mrf.mxu0
      %v1401 = vadd.f32 %v1336, %v1400
      %1402 = vmatmul.f32.gmra.mxu0 %v1143
      %v1403 = vpop.f32.mrf.mxu0
      %v1404 = vadd.f32 %v1339, %v1403
      %1405 = vmatmul.f32.gmra.mxu0 %v1144
      %v1406 = vpop.f32.mrf.mxu0
      %v1407 = vadd.f32 %v1342, %v1406
      %1408 = vmatmul.f32.gmra.mxu0 %v1145
      %v1409 = vpop.f32.mrf.mxu0
      %v1410 = vadd.f32 %v1345, %v1409
      %1411 = vmatmul.f32.gmra.mxu0 %v1146
      %v1412 = vpop.f32.mrf.mxu0
      %v1413 = vadd.f32 %v1348, %v1412
      %1414 = vmatmul.f32.gmra.mxu0 %v1147
      %v1415 = vpop.f32.mrf.mxu0
      %v1416 = vadd.f32 %v1351, %v1415
      %1417 = vmatmul.f32.gmra.mxu0 %v1148
      %v1418 = vpop.f32.mrf.mxu0
      %v1419 = vadd.f32 %v1354, %v1418
      %1420 = vmatmul.f32.gmra.mxu0 %v1149
      %v1421 = vpop.f32.mrf.mxu0
      %v1422 = vadd.f32 %v1357, %v1421
      %1423 = vmatmul.f32.gmra.mxu0 %v1150
      %v1424 = vpop.f32.mrf.mxu0
      %v1425 = vadd.f32 %v1360, %v1424
      %1426 = vmatmul.f32.gmra.mxu0 %v1151
      %v1427 = vpop.f32.mrf.mxu0
      %v1428 = vadd.f32 %v1363, %v1427
      %1429 = vmatmul.f32.gmra.mxu0 %v1152
      %v1430 = vpop.f32.mrf.mxu0
      %v1431 = vadd.f32 %v1366, %v1430
      %1432 = vdwg.mxu0
      %1433 = vmatpush.msra.mxu0 %v1297
      %1434 = vmatpush.msra.mxu0 %v1296
      %1435 = vmatpush.msra.mxu0 %v1295
      %1436 = vmatpush.msra.mxu0 %v1294
      %1437 = vmatpush.msra.mxu0 %v1293
      %1438 = vmatpush.msra.mxu0 %v1292
      %1439 = vmatpush.msra.mxu0 %v1291
      %1440 = vmatpush.msra.mxu0 %v1290
      %1441 = vmatpush.msra.mxu0 %v1289
      %1442 = vmatpush.msra.mxu0 %v1288
      %1443 = vmatpush.msra.mxu0 %v1287
      %1444 = vmatpush.msra.mxu0 %v1286
      %1445 = vmatpush.msra.mxu0 %v1285
      %1446 = vmatpush.msra.mxu0 %v1284
      %1447 = vmatpush.msra.mxu0 %v1283
      %1448 = vmatpush.msra.mxu0 %v1282
      %1449 = vmatmul.f32.gmra.mxu0 %v1233
      %v1450 = vpop.f32.mrf.mxu0
      %v1451 = vadd.f32 %v1386, %v1450
      %1452 = vmatmul.f32.gmra.mxu0 %v1234
      %v1453 = vpop.f32.mrf.mxu0
      %v1454 = vadd.f32 %v1389, %v1453
      %1455 = vmatmul.f32.gmra.mxu0 %v1235
      %v1456 = vpop.f32.mrf.mxu0
      %v1457 = vadd.f32 %v1392, %v1456
      %1458 = vmatmul.f32.gmra.mxu0 %v1236
      %v1459 = vpop.f32.mrf.mxu0
      %v1460 = vadd.f32 %v1395, %v1459
      %1461 = vmatmul.f32.gmra.mxu0 %v1237
      %v1462 = vpop.f32.mrf.mxu0
      %v1463 = vadd.f32 %v1398, %v1462
      %1464 = vmatmul.f32.gmra.mxu0 %v1238
      %v1465 = vpop.f32.mrf.mxu0
      %v1466 = vadd.f32 %v1401, %v1465
      %1467 = vmatmul.f32.gmra.mxu0 %v1239
      %v1468 = vpop.f32.mrf.mxu0
      %v1469 = vadd.f32 %v1404, %v1468
      %1470 = vmatmul.f32.gmra.mxu0 %v1240
      %v1471 = vpop.f32.mrf.mxu0
      %v1472 = vadd.f32 %v1407, %v1471
      %1473 = vmatmul.f32.gmra.mxu0 %v1241
      %v1474 = vpop.f32.mrf.mxu0
      %v1475 = vadd.f32 %v1410, %v1474
      %1476 = vmatmul.f32.gmra.mxu0 %v1242
      %v1477 = vpop.f32.mrf.mxu0
      %v1478 = vadd.f32 %v1413, %v1477
      %1479 = vmatmul.f32.gmra.mxu0 %v1243
      %v1480 = vpop.f32.mrf.mxu0
      %v1481 = vadd.f32 %v1416, %v1480
      %1482 = vmatmul.f32.gmra.mxu0 %v1244
      %v1483 = vpop.f32.mrf.mxu0
      %v1484 = vadd.f32 %v1419, %v1483
      %1485 = vmatmul.f32.gmra.mxu0 %v1245
      %v1486 = vpop.f32.mrf.mxu0
      %v1487 = vadd.f32 %v1422, %v1486
      %1488 = vmatmul.f32.gmra.mxu0 %v1246
      %v1489 = vpop.f32.mrf.mxu0
      %v1490 = vadd.f32 %v1425, %v1489
      %1491 = vmatmul.f32.gmra.mxu0 %v1247
      %v1492 = vpop.f32.mrf.mxu0
      %v1493 = vadd.f32 %v1428, %v1492
      %1494 = vmatmul.f32.gmra.mxu0 %v1248
      %v1495 = vpop.f32.mrf.mxu0
      %v1496 = vadd.f32 %v1431, %v1495
      %1497 = vdwg.mxu0
      %v1498 = vmax.f32 %v1451, 0.0
      %v1499 = vmax.f32 %v1454, 0.0
      %v1500 = vmax.f32 %v1457, 0.0
      %v1501 = vmax.f32 %v1460, 0.0
      %v1502 = vmax.f32 %v1463, 0.0
      %v1503 = vmax.f32 %v1466, 0.0
      %v1504 = vmax.f32 %v1469, 0.0
      %v1505 = vmax.f32 %v1472, 0.0
      %v1506 = vmax.f32 %v1475, 0.0
      %v1507 = vmax.f32 %v1478, 0.0
      %v1508 = vmax.f32 %v1481, 0.0
      %v1509 = vmax.f32 %v1484, 0.0
      %v1510 = vmax.f32 %v1487, 0.0
      %v1511 = vmax.f32 %v1490, 0.0
      %v1512 = vmax.f32 %v1493, 0.0
      %v1513 = vmax.f32 %v1496, 0.0
      %v1514 = vrot.slane %v1498, 7
      %v1515 = vrot.slane %v1499, 7
      %v1516 = vrot.slane %v1500, 7
      %v1517 = vrot.slane %v1501, 7
      %v1518 = vrot.slane %v1502, 7
      %v1519 = vrot.slane %v1503, 7
      %v1520 = vrot.slane %v1504, 7
      %v1521 = vrot.slane %v1505, 7
      %v1522 = vrot.slane %v1506, 7
      %v1523 = vrot.slane %v1507, 7
      %v1524 = vrot.slane %v1508, 7
      %v1525 = vrot.slane %v1509, 7
      %v1526 = vrot.slane %v1510, 7
      %v1527 = vrot.slane %v1511, 7
      %v1528 = vrot.slane %v1512, 7
      %v1529 = vrot.slane %v1513, 7
      %v1530 = vsel %vm447, %v1528, %v1529
      %v1531 = vsel %vm447, %v1527, %v1528
      %v1532 = vsel %vm447, %v1526, %v1527
      %v1533 = vsel %vm447, %v1525, %v1526
      %v1534 = vsel %vm447, %v1524, %v1525
      %v1535 = vsel %vm447, %v1523, %v1524
      %v1536 = vsel %vm447, %v1522, %v1523
      %v1537 = vsel %vm447, %v1521, %v1522
      %v1538 = vsel %vm447, %v1520, %v1521
      %v1539 = vsel %vm447, %v1519, %v1520
      %v1540 = vsel %vm447, %v1518, %v1519
      %v1541 = vsel %vm447, %v1517, %v1518
      %v1542 = vsel %vm447, %v1516, %v1517
      %v1543 = vsel %vm447, %v1515, %v1516
      %v1544 = vsel %vm447, %v1514, %v1515
      %v1545 = vsel %vm447, %v1529, %v1514
      %v1546 = vsel %vm383, 0.0, %v1545
      %v1547 = vsel %vm384, 0.0, %v1544
      %v1548 = vsel %vm385, 0.0, %v1543
      %v1549 = vsel %vm386, 0.0, %v1542
      %v1550 = vsel %vm387, 0.0, %v1541
      %v1551 = vsel %vm388, 0.0, %v1540
      %v1552 = vsel %vm389, 0.0, %v1539
      %v1553 = vsel %vm390, 0.0, %v1538
      %v1554 = vsel %vm391, 0.0, %v1537
      %v1555 = vsel %vm392, 0.0, %v1536
      %v1556 = vsel %vm393, 0.0, %v1535
      %v1557 = vsel %vm394, 0.0, %v1534
      %v1558 = vsel %vm395, 0.0, %v1533
      %v1559 = vsel %vm396, 0.0, %v1532
      %v1560 = vsel %vm397, 0.0, %v1531
      %v1561 = vsel %vm398, 0.0, %v1530
      %v1562 = vrot.slane %v1498, 1
      %v1563 = vrot.slane %v1499, 1
      %v1564 = vrot.slane %v1500, 1
      %v1565 = vrot.slane %v1501, 1
      %v1566 = vrot.slane %v1502, 1
      %v1567 = vrot.slane %v1503, 1
      %v1568 = vrot.slane %v1504, 1
      %v1569 = vrot.slane %v1505, 1
      %v1570 = vrot.slane %v1506, 1
      %v1571 = vrot.slane %v1507, 1
      %v1572 = vrot.slane %v1508, 1
      %v1573 = vrot.slane %v1509, 1
      %v1574 = vrot.slane %v1510, 1
      %v1575 = vrot.slane %v1511, 1
      %v1576 = vrot.slane %v1512, 1
      %v1577 = vrot.slane %v1513, 1
      %v1578 = vsel %vm496, %v1576, %v1577
      %v1579 = vsel %vm496, %v1575, %v1576
      %v1580 = vsel %vm496, %v1574, %v1575
      %v1581 = vsel %vm496, %v1573, %v1574
      %v1582 = vsel %vm496, %v1572, %v1573
      %v1583 = vsel %vm496, %v1571, %v1572
      %v1584 = vsel %vm496, %v1570, %v1571
      %v1585 = vsel %vm496, %v1569, %v1570
      %v1586 = vsel %vm496, %v1568, %v1569
      %v1587 = vsel %vm496, %v1567, %v1568
      %v1588 = vsel %vm496, %v1566, %v1567
      %v1589 = vsel %vm496, %v1565, %v1566
      %v1590 = vsel %vm496, %v1564, %v1565
      %v1591 = vsel %vm496, %v1563, %v1564
      %v1592 = vsel %vm496, %v1562, %v1563
      %v1593 = vsel %vm496, %v1577, %v1562
      %v1594 = vsel %vm399, 0.0, %v1592
      %v1595 = vsel %vm400, 0.0, %v1591
      %v1596 = vsel %vm401, 0.0, %v1590
      %v1597 = vsel %vm402, 0.0, %v1589
      %v1598 = vsel %vm403, 0.0, %v1588
      %v1599 = vsel %vm404, 0.0, %v1587
      %v1600 = vsel %vm405, 0.0, %v1586
      %v1601 = vsel %vm406, 0.0, %v1585
      %v1602 = vsel %vm407, 0.0, %v1584
      %v1603 = vsel %vm408, 0.0, %v1583
      %v1604 = vsel %vm409, 0.0, %v1582
      %v1605 = vsel %vm410, 0.0, %v1581
      %v1606 = vsel %vm411, 0.0, %v1580
      %v1607 = vsel %vm412, 0.0, %v1579
      %v1608 = vsel %vm413, 0.0, %v1578
      %v1609 = vsel %vm414, 0.0, %v1593
      %s1610 = scalar_lea.vmem %s1, 1152
      %v1611 = vld [vmem:[%s1610] sm:$0xff]
      %v1612 = vld [vmem:[%s1610 + $0x8] sm:$0xff]
      %v1613 = vld [vmem:[%s1610 + $0x10] sm:$0xff]
      %v1614 = vld [vmem:[%s1610 + $0x18] sm:$0xff]
      %v1615 = vld [vmem:[%s1610 + $0x20] sm:$0xff]
      %v1616 = vld [vmem:[%s1610 + $0x28] sm:$0xff]
      %v1617 = vld [vmem:[%s1610 + $0x30] sm:$0xff]
      %v1618 = vld [vmem:[%s1610 + $0x38] sm:$0xff]
      %v1619 = vld [vmem:[%s1610 + $0x40] sm:$0xff]
      %v1620 = vld [vmem:[%s1610 + $0x48] sm:$0xff]
      %v1621 = vld [vmem:[%s1610 + $0x50] sm:$0xff]
      %v1622 = vld [vmem:[%s1610 + $0x58] sm:$0xff]
      %v1623 = vld [vmem:[%s1610 + $0x60] sm:$0xff]
      %v1624 = vld [vmem:[%s1610 + $0x68] sm:$0xff]
      %v1625 = vld [vmem:[%s1610 + $0x70] sm:$0xff]
      %v1626 = vld [vmem:[%s1610 + $0x78] sm:$0xff]
      %v1627 = vld [vmem:[%s1610 + $0x80] sm:$0xff]
      %v1628 = vld [vmem:[%s1610 + $0x88] sm:$0xff]
      %v1629 = vld [vmem:[%s1610 + $0x90] sm:$0xff]
      %v1630 = vld [vmem:[%s1610 + $0x98] sm:$0xff]
      %v1631 = vld [vmem:[%s1610 + $0xa0] sm:$0xff]
      %v1632 = vld [vmem:[%s1610 + $0xa8] sm:$0xff]
      %v1633 = vld [vmem:[%s1610 + $0xb0] sm:$0xff]
      %v1634 = vld [vmem:[%s1610 + $0xb8] sm:$0xff]
      %v1635 = vld [vmem:[%s1610 + $0xc0] sm:$0xff]
      %v1636 = vld [vmem:[%s1610 + $0xc8] sm:$0xff]
      %v1637 = vld [vmem:[%s1610 + $0xd0] sm:$0xff]
      %v1638 = vld [vmem:[%s1610 + $0xd8] sm:$0xff]
      %v1639 = vld [vmem:[%s1610 + $0xe0] sm:$0xff]
      %v1640 = vld [vmem:[%s1610 + $0xe8] sm:$0xff]
      %v1641 = vld [vmem:[%s1610 + $0xf0] sm:$0xff]
      %v1642 = vld [vmem:[%s1610 + $0xf8] sm:$0xff]
      %v1643 = vld [vmem:[%s1610 + $0x100] sm:$0xff]
      %v1644 = vld [vmem:[%s1610 + $0x108] sm:$0xff]
      %v1645 = vld [vmem:[%s1610 + $0x110] sm:$0xff]
      %v1646 = vld [vmem:[%s1610 + $0x118] sm:$0xff]
      %v1647 = vld [vmem:[%s1610 + $0x120] sm:$0xff]
      %v1648 = vld [vmem:[%s1610 + $0x128] sm:$0xff]
      %v1649 = vld [vmem:[%s1610 + $0x130] sm:$0xff]
      %v1650 = vld [vmem:[%s1610 + $0x138] sm:$0xff]
      %v1651 = vld [vmem:[%s1610 + $0x140] sm:$0xff]
      %v1652 = vld [vmem:[%s1610 + $0x148] sm:$0xff]
      %v1653 = vld [vmem:[%s1610 + $0x150] sm:$0xff]
      %v1654 = vld [vmem:[%s1610 + $0x158] sm:$0xff]
      %v1655 = vld [vmem:[%s1610 + $0x160] sm:$0xff]
      %v1656 = vld [vmem:[%s1610 + $0x168] sm:$0xff]
      %v1657 = vld [vmem:[%s1610 + $0x170] sm:$0xff]
      %v1658 = vld [vmem:[%s1610 + $0x178] sm:$0xff]
      %s1659 = scalar_lea.vmem %s2, 3
      %v1660 = vld [vmem:[%s1659] sm:$0x1]
      %v1662 = vperm.slane %v1660, 0
      %1664 = vmatpush.msra.mxu0 %v1626
      %1665 = vmatpush.msra.mxu0 %v1625
      %1666 = vmatpush.msra.mxu0 %v1624
      %1667 = vmatpush.msra.mxu0 %v1623
      %1668 = vmatpush.msra.mxu0 %v1622
      %1669 = vmatpush.msra.mxu0 %v1621
      %1670 = vmatpush.msra.mxu0 %v1620
      %1671 = vmatpush.msra.mxu0 %v1619
      %1672 = vmatpush.msra.mxu0 %v1618
      %1673 = vmatpush.msra.mxu0 %v1617
      %1674 = vmatpush.msra.mxu0 %v1616
      %1675 = vmatpush.msra.mxu0 %v1615
      %1676 = vmatpush.msra.mxu0 %v1614
      %1677 = vmatpush.msra.mxu0 %v1613
      %1678 = vmatpush.msra.mxu0 %v1612
      %1679 = vmatpush.msra.mxu0 %v1611
      %1680 = vmatmul.f32.gmra.mxu0 %v1546
      %v1681 = vpop.f32.mrf.mxu0
      %v1682 = vadd.f32 %v1662, %v1681
      %1683 = vmatmul.f32.gmra.mxu0 %v1547
      %v1684 = vpop.f32.mrf.mxu0
      %v1685 = vadd.f32 %v1662, %v1684
      %1686 = vmatmul.f32.gmra.mxu0 %v1548
      %v1687 = vpop.f32.mrf.mxu0
      %v1688 = vadd.f32 %v1662, %v1687
      %1689 = vmatmul.f32.gmra.mxu0 %v1549
      %v1690 = vpop.f32.mrf.mxu0
      %v1691 = vadd.f32 %v1662, %v1690
      %1692 = vmatmul.f32.gmra.mxu0 %v1550
      %v1693 = vpop.f32.mrf.mxu0
      %v1694 = vadd.f32 %v1662, %v1693
      %1695 = vmatmul.f32.gmra.mxu0 %v1551
      %v1696 = vpop.f32.mrf.mxu0
      %v1697 = vadd.f32 %v1662, %v1696
      %1698 = vmatmul.f32.gmra.mxu0 %v1552
      %v1699 = vpop.f32.mrf.mxu0
      %v1700 = vadd.f32 %v1662, %v1699
      %1701 = vmatmul.f32.gmra.mxu0 %v1553
      %v1702 = vpop.f32.mrf.mxu0
      %v1703 = vadd.f32 %v1662, %v1702
      %1704 = vmatmul.f32.gmra.mxu0 %v1554
      %v1705 = vpop.f32.mrf.mxu0
      %v1706 = vadd.f32 %v1662, %v1705
      %1707 = vmatmul.f32.gmra.mxu0 %v1555
      %v1708 = vpop.f32.mrf.mxu0
      %v1709 = vadd.f32 %v1662, %v1708
      %1710 = vmatmul.f32.gmra.mxu0 %v1556
      %v1711 = vpop.f32.mrf.mxu0
      %v1712 = vadd.f32 %v1662, %v1711
      %1713 = vmatmul.f32.gmra.mxu0 %v1557
      %v1714 = vpop.f32.mrf.mxu0
      %v1715 = vadd.f32 %v1662, %v1714
      %1716 = vmatmul.f32.gmra.mxu0 %v1558
      %v1717 = vpop.f32.mrf.mxu0
      %v1718 = vadd.f32 %v1662, %v1717
      %1719 = vmatmul.f32.gmra.mxu0 %v1559
      %v1720 = vpop.f32.mrf.mxu0
      %v1721 = vadd.f32 %v1662, %v1720
      %1722 = vmatmul.f32.gmra.mxu0 %v1560
      %v1723 = vpop.f32.mrf.mxu0
      %v1724 = vadd.f32 %v1662, %v1723
      %1725 = vmatmul.f32.gmra.mxu0 %v1561
      %v1726 = vpop.f32.mrf.mxu0
      %v1727 = vadd.f32 %v1662, %v1726
      %1728 = vdwg.mxu0
      %1729 = vmatpush.msra.mxu0 %v1642
      %1730 = vmatpush.msra.mxu0 %v1641
      %1731 = vmatpush.msra.mxu0 %v1640
      %1732 = vmatpush.msra.mxu0 %v1639
      %1733 = vmatpush.msra.mxu0 %v1638
      %1734 = vmatpush.msra.mxu0 %v1637
      %1735 = vmatpush.msra.mxu0 %v1636
      %1736 = vmatpush.msra.mxu0 %v1635
      %1737 = vmatpush.msra.mxu0 %v1634
      %1738 = vmatpush.msra.mxu0 %v1633
      %1739 = vmatpush.msra.mxu0 %v1632
      %1740 = vmatpush.msra.mxu0 %v1631
      %1741 = vmatpush.msra.mxu0 %v1630
      %1742 = vmatpush.msra.mxu0 %v1629
      %1743 = vmatpush.msra.mxu0 %v1628
      %1744 = vmatpush.msra.mxu0 %v1627
      %1745 = vmatmul.f32.gmra.mxu0 %v1498
      %v1746 = vpop.f32.mrf.mxu0
      %v1747 = vadd.f32 %v1682, %v1746
      %1748 = vmatmul.f32.gmra.mxu0 %v1499
      %v1749 = vpop.f32.mrf.mxu0
      %v1750 = vadd.f32 %v1685, %v1749
      %1751 = vmatmul.f32.gmra.mxu0 %v1500
      %v1752 = vpop.f32.mrf.mxu0
      %v1753 = vadd.f32 %v1688, %v1752
      %1754 = vmatmul.f32.gmra.mxu0 %v1501
      %v1755 = vpop.f32.mrf.mxu0
      %v1756 = vadd.f32 %v1691, %v1755
      %1757 = vmatmul.f32.gmra.mxu0 %v1502
      %v1758 = vpop.f32.mrf.mxu0
      %v1759 = vadd.f32 %v1694, %v1758
      %1760 = vmatmul.f32.gmra.mxu0 %v1503
      %v1761 = vpop.f32.mrf.mxu0
      %v1762 = vadd.f32 %v1697, %v1761
      %1763 = vmatmul.f32.gmra.mxu0 %v1504
      %v1764 = vpop.f32.mrf.mxu0
      %v1765 = vadd.f32 %v1700, %v1764
      %1766 = vmatmul.f32.gmra.mxu0 %v1505
      %v1767 = vpop.f32.mrf.mxu0
      %v1768 = vadd.f32 %v1703, %v1767
      %1769 = vmatmul.f32.gmra.mxu0 %v1506
      %v1770 = vpop.f32.mrf.mxu0
      %v1771 = vadd.f32 %v1706, %v1770
      %1772 = vmatmul.f32.gmra.mxu0 %v1507
      %v1773 = vpop.f32.mrf.mxu0
      %v1774 = vadd.f32 %v1709, %v1773
      %1775 = vmatmul.f32.gmra.mxu0 %v1508
      %v1776 = vpop.f32.mrf.mxu0
      %v1777 = vadd.f32 %v1712, %v1776
      %1778 = vmatmul.f32.gmra.mxu0 %v1509
      %v1779 = vpop.f32.mrf.mxu0
      %v1780 = vadd.f32 %v1715, %v1779
      %1781 = vmatmul.f32.gmra.mxu0 %v1510
      %v1782 = vpop.f32.mrf.mxu0
      %v1783 = vadd.f32 %v1718, %v1782
      %1784 = vmatmul.f32.gmra.mxu0 %v1511
      %v1785 = vpop.f32.mrf.mxu0
      %v1786 = vadd.f32 %v1721, %v1785
      %1787 = vmatmul.f32.gmra.mxu0 %v1512
      %v1788 = vpop.f32.mrf.mxu0
      %v1789 = vadd.f32 %v1724, %v1788
      %1790 = vmatmul.f32.gmra.mxu0 %v1513
      %v1791 = vpop.f32.mrf.mxu0
      %v1792 = vadd.f32 %v1727, %v1791
      %1793 = vdwg.mxu0
      %1794 = vmatpush.msra.mxu0 %v1658
      %1795 = vmatpush.msra.mxu0 %v1657
      %1796 = vmatpush.msra.mxu0 %v1656
      %1797 = vmatpush.msra.mxu0 %v1655
      %1798 = vmatpush.msra.mxu0 %v1654
      %1799 = vmatpush.msra.mxu0 %v1653
      %1800 = vmatpush.msra.mxu0 %v1652
      %1801 = vmatpush.msra.mxu0 %v1651
      %1802 = vmatpush.msra.mxu0 %v1650
      %1803 = vmatpush.msra.mxu0 %v1649
      %1804 = vmatpush.msra.mxu0 %v1648
      %1805 = vmatpush.msra.mxu0 %v1647
      %1806 = vmatpush.msra.mxu0 %v1646
      %1807 = vmatpush.msra.mxu0 %v1645
      %1808 = vmatpush.msra.mxu0 %v1644
      %1809 = vmatpush.msra.mxu0 %v1643
      %1810 = vmatmul.f32.gmra.mxu0 %v1594
      %v1811 = vpop.f32.mrf.mxu0
      %v1812 = vadd.f32 %v1747, %v1811
      %1813 = vmatmul.f32.gmra.mxu0 %v1595
      %v1814 = vpop.f32.mrf.mxu0
      %v1815 = vadd.f32 %v1750, %v1814
      %1816 = vmatmul.f32.gmra.mxu0 %v1596
      %v1817 = vpop.f32.mrf.mxu0
      %v1818 = vadd.f32 %v1753, %v1817
      %1819 = vmatmul.f32.gmra.mxu0 %v1597
      %v1820 = vpop.f32.mrf.mxu0
      %v1821 = vadd.f32 %v1756, %v1820
      %1822 = vmatmul.f32.gmra.mxu0 %v1598
      %v1823 = vpop.f32.mrf.mxu0
      %v1824 = vadd.f32 %v1759, %v1823
      %1825 = vmatmul.f32.gmra.mxu0 %v1599
      %v1826 = vpop.f32.mrf.mxu0
      %v1827 = vadd.f32 %v1762, %v1826
      %1828 = vmatmul.f32.gmra.mxu0 %v1600
      %v1829 = vpop.f32.mrf.mxu0
      %v1830 = vadd.f32 %v1765, %v1829
      %1831 = vmatmul.f32.gmra.mxu0 %v1601
      %v1832 = vpop.f32.mrf.mxu0
      %v1833 = vadd.f32 %v1768, %v1832
      %1834 = vmatmul.f32.gmra.mxu0 %v1602
      %v1835 = vpop.f32.mrf.mxu0
      %v1836 = vadd.f32 %v1771, %v1835
      %1837 = vmatmul.f32.gmra.mxu0 %v1603
      %v1838 = vpop.f32.mrf.mxu0
      %v1839 = vadd.f32 %v1774, %v1838
      %1840 = vmatmul.f32.gmra.mxu0 %v1604
      %v1841 = vpop.f32.mrf.mxu0
      %v1842 = vadd.f32 %v1777, %v1841
      %1843 = vmatmul.f32.gmra.mxu0 %v1605
      %v1844 = vpop.f32.mrf.mxu0
      %v1845 = vadd.f32 %v1780, %v1844
      %1846 = vmatmul.f32.gmra.mxu0 %v1606
      %v1847 = vpop.f32.mrf.mxu0
      %v1848 = vadd.f32 %v1783, %v1847
      %1849 = vmatmul.f32.gmra.mxu0 %v1607
      %v1850 = vpop.f32.mrf.mxu0
      %v1851 = vadd.f32 %v1786, %v1850
      %1852 = vmatmul.f32.gmra.mxu0 %v1608
      %v1853 = vpop.f32.mrf.mxu0
      %v1854 = vadd.f32 %v1789, %v1853
      %1855 = vmatmul.f32.gmra.mxu0 %v1609
      %v1856 = vpop.f32.mrf.mxu0
      %v1857 = vadd.f32 %v1792, %v1856
      %1858 = vdwg.mxu0
      %v1859 = vadd.f32 %v1137, %v1812
      %v1860 = vadd.f32 %v1138, %v1815
      %v1861 = vadd.f32 %v1139, %v1818
      %v1862 = vadd.f32 %v1140, %v1821
      %v1863 = vadd.f32 %v1141, %v1824
      %v1864 = vadd.f32 %v1142, %v1827
      %v1865 = vadd.f32 %v1143, %v1830
      %v1866 = vadd.f32 %v1144, %v1833
      %v1867 = vadd.f32 %v1145, %v1836
      %v1868 = vadd.f32 %v1146, %v1839
      %v1869 = vadd.f32 %v1147, %v1842
      %v1870 = vadd.f32 %v1148, %v1845
      %v1871 = vadd.f32 %v1149, %v1848
      %v1872 = vadd.f32 %v1150, %v1851
      %v1873 = vadd.f32 %v1151, %v1854
      %v1874 = vadd.f32 %v1152, %v1857
      %v1875 = vrot.slane %v1859, 7
      %v1876 = vrot.slane %v1860, 7
      %v1877 = vrot.slane %v1861, 7
      %v1878 = vrot.slane %v1862, 7
      %v1879 = vrot.slane %v1863, 7
      %v1880 = vrot.slane %v1864, 7
      %v1881 = vrot.slane %v1865, 7
      %v1882 = vrot.slane %v1866, 7
      %v1883 = vrot.slane %v1867, 7
      %v1884 = vrot.slane %v1868, 7
      %v1885 = vrot.slane %v1869, 7
      %v1886 = vrot.slane %v1870, 7
      %v1887 = vrot.slane %v1871, 7
      %v1888 = vrot.slane %v1872, 7
      %v1889 = vrot.slane %v1873, 7
      %v1890 = vrot.slane %v1874, 7
      %v1891 = vsel %vm447, %v1889, %v1890
      %v1892 = vsel %vm447, %v1888, %v1889
      %v1893 = vsel %vm447, %v1887, %v1888
      %v1894 = vsel %vm447, %v1886, %v1887
      %v1895 = vsel %vm447, %v1885, %v1886
      %v1896 = vsel %vm447, %v1884, %v1885
      %v1897 = vsel %vm447, %v1883, %v1884
      %v1898 = vsel %vm447, %v1882, %v1883
      %v1899 = vsel %vm447, %v1881, %v1882
      %v1900 = vsel %vm447, %v1880, %v1881
      %v1901 = vsel %vm447, %v1879, %v1880
      %v1902 = vsel %vm447, %v1878, %v1879
      %v1903 = vsel %vm447, %v1877, %v1878
      %v1904 = vsel %vm447, %v1876, %v1877
      %v1905 = vsel %vm447, %v1875, %v1876
      %v1906 = vsel %vm447, %v1890, %v1875
      %v1907 = vsel %vm383, 0.0, %v1906
      %v1908 = vsel %vm384, 0.0, %v1905
      %v1909 = vsel %vm385, 0.0, %v1904
      %v1910 = vsel %vm386, 0.0, %v1903
      %v1911 = vsel %vm387, 0.0, %v1902
      %v1912 = vsel %vm388, 0.0, %v1901
      %v1913 = vsel %vm389, 0.0, %v1900
      %v1914 = vsel %vm390, 0.0, %v1899
      %v1915 = vsel %vm391, 0.0, %v1898
      %v1916 = vsel %vm392, 0.0, %v1897
      %v1917 = vsel %vm393, 0.0, %v1896
      %v1918 = vsel %vm394, 0.0, %v1895
      %v1919 = vsel %vm395, 0.0, %v1894
      %v1920 = vsel %vm396, 0.0, %v1893
      %v1921 = vsel %vm397, 0.0, %v1892
      %v1922 = vsel %vm398, 0.0, %v1891
      %v1923 = vrot.slane %v1859, 1
      %v1924 = vrot.slane %v1860, 1
      %v1925 = vrot.slane %v1861, 1
      %v1926 = vrot.slane %v1862, 1
      %v1927 = vrot.slane %v1863, 1
      %v1928 = vrot.slane %v1864, 1
      %v1929 = vrot.slane %v1865, 1
      %v1930 = vrot.slane %v1866, 1
      %v1931 = vrot.slane %v1867, 1
      %v1932 = vrot.slane %v1868, 1
      %v1933 = vrot.slane %v1869, 1
      %v1934 = vrot.slane %v1870, 1
      %v1935 = vrot.slane %v1871, 1
      %v1936 = vrot.slane %v1872, 1
      %v1937 = vrot.slane %v1873, 1
      %v1938 = vrot.slane %v1874, 1
      %v1939 = vsel %vm496, %v1937, %v1938
      %v1940 = vsel %vm496, %v1936, %v1937
      %v1941 = vsel %vm496, %v1935, %v1936
      %v1942 = vsel %vm496, %v1934, %v1935
      %v1943 = vsel %vm496, %v1933, %v1934
      %v1944 = vsel %vm496, %v1932, %v1933
      %v1945 = vsel %vm496, %v1931, %v1932
      %v1946 = vsel %vm496, %v1930, %v1931
      %v1947 = vsel %vm496, %v1929, %v1930
      %v1948 = vsel %vm496, %v1928, %v1929
      %v1949 = vsel %vm496, %v1927, %v1928
      %v1950 = vsel %vm496, %v1926, %v1927
      %v1951 = vsel %vm496, %v1925, %v1926
      %v1952 = vsel %vm496, %v1924, %v1925
      %v1953 = vsel %vm496, %v1923, %v1924
      %v1954 = vsel %vm496, %v1938, %v1923
      %v1955 = vsel %vm399, 0.0, %v1953
      %v1956 = vsel %vm400, 0.0, %v1952
      %v1957 = vsel %vm401, 0.0, %v1951
      %v1958 = vsel %vm402, 0.0, %v1950
      %v1959 = vsel %vm403, 0.0, %v1949
      %v1960 = vsel %vm404, 0.0, %v1948
      %v1961 = vsel %vm405, 0.0, %v1947
      %v1962 = vsel %vm406, 0.0, %v1946
      %v1963 = vsel %vm407, 0.0, %v1945
      %v1964 = vsel %vm408, 0.0, %v1944
      %v1965 = vsel %vm409, 0.0, %v1943
      %v1966 = vsel %vm410, 0.0, %v1942
      %v1967 = vsel %vm411, 0.0, %v1941
      %v1968 = vsel %vm412, 0.0, %v1940
      %v1969 = vsel %vm413, 0.0, %v1939
      %v1970 = vsel %vm414, 0.0, %v1954
      %s1971 = scalar_lea.vmem %s1, 1536
      %v1972 = vld [vmem:[%s1971] sm:$0xff]
      %v1973 = vld [vmem:[%s1971 + $0x8] sm:$0xff]
      %v1974 = vld [vmem:[%s1971 + $0x10] sm:$0xff]
      %v1975 = vld [vmem:[%s1971 + $0x18] sm:$0xff]
      %v1976 = vld [vmem:[%s1971 + $0x20] sm:$0xff]
      %v1977 = vld [vmem:[%s1971 + $0x28] sm:$0xff]
      %v1978 = vld [vmem:[%s1971 + $0x30] sm:$0xff]
      %v1979 = vld [vmem:[%s1971 + $0x38] sm:$0xff]
      %v1980 = vld [vmem:[%s1971 + $0x40] sm:$0xff]
      %v1981 = vld [vmem:[%s1971 + $0x48] sm:$0xff]
      %v1982 = vld [vmem:[%s1971 + $0x50] sm:$0xff]
      %v1983 = vld [vmem:[%s1971 + $0x58] sm:$0xff]
      %v1984 = vld [vmem:[%s1971 + $0x60] sm:$0xff]
      %v1985 = vld [vmem:[%s1971 + $0x68] sm:$0xff]
      %v1986 = vld [vmem:[%s1971 + $0x70] sm:$0xff]
      %v1987 = vld [vmem:[%s1971 + $0x78] sm:$0xff]
      %v1988 = vld [vmem:[%s1971 + $0x80] sm:$0xff]
      %v1989 = vld [vmem:[%s1971 + $0x88] sm:$0xff]
      %v1990 = vld [vmem:[%s1971 + $0x90] sm:$0xff]
      %v1991 = vld [vmem:[%s1971 + $0x98] sm:$0xff]
      %v1992 = vld [vmem:[%s1971 + $0xa0] sm:$0xff]
      %v1993 = vld [vmem:[%s1971 + $0xa8] sm:$0xff]
      %v1994 = vld [vmem:[%s1971 + $0xb0] sm:$0xff]
      %v1995 = vld [vmem:[%s1971 + $0xb8] sm:$0xff]
      %v1996 = vld [vmem:[%s1971 + $0xc0] sm:$0xff]
      %v1997 = vld [vmem:[%s1971 + $0xc8] sm:$0xff]
      %v1998 = vld [vmem:[%s1971 + $0xd0] sm:$0xff]
      %v1999 = vld [vmem:[%s1971 + $0xd8] sm:$0xff]
      %v2000 = vld [vmem:[%s1971 + $0xe0] sm:$0xff]
      %v2001 = vld [vmem:[%s1971 + $0xe8] sm:$0xff]
      %v2002 = vld [vmem:[%s1971 + $0xf0] sm:$0xff]
      %v2003 = vld [vmem:[%s1971 + $0xf8] sm:$0xff]
      %v2004 = vld [vmem:[%s1971 + $0x100] sm:$0xff]
      %v2005 = vld [vmem:[%s1971 + $0x108] sm:$0xff]
      %v2006 = vld [vmem:[%s1971 + $0x110] sm:$0xff]
      %v2007 = vld [vmem:[%s1971 + $0x118] sm:$0xff]
      %v2008 = vld [vmem:[%s1971 + $0x120] sm:$0xff]
      %v2009 = vld [vmem:[%s1971 + $0x128] sm:$0xff]
      %v2010 = vld [vmem:[%s1971 + $0x130] sm:$0xff]
      %v2011 = vld [vmem:[%s1971 + $0x138] sm:$0xff]
      %v2012 = vld [vmem:[%s1971 + $0x140] sm:$0xff]
      %v2013 = vld [vmem:[%s1971 + $0x148] sm:$0xff]
      %v2014 = vld [vmem:[%s1971 + $0x150] sm:$0xff]
      %v2015 = vld [vmem:[%s1971 + $0x158] sm:$0xff]
      %v2016 = vld [vmem:[%s1971 + $0x160] sm:$0xff]
      %v2017 = vld [vmem:[%s1971 + $0x168] sm:$0xff]
      %v2018 = vld [vmem:[%s1971 + $0x170] sm:$0xff]
      %v2019 = vld [vmem:[%s1971 + $0x178] sm:$0xff]
      %s2020 = scalar_lea.vmem %s2, 4
      %v2021 = vld [vmem:[%s2020] sm:$0x1]
      %v2023 = vperm.slane %v2021, 0
      %2025 = vmatpush.msra.mxu0 %v1987
      %2026 = vmatpush.msra.mxu0 %v1986
      %2027 = vmatpush.msra.mxu0 %v1985
      %2028 = vmatpush.msra.mxu0 %v1984
      %2029 = vmatpush.msra.mxu0 %v1983
      %2030 = vmatpush.msra.mxu0 %v1982
      %2031 = vmatpush.msra.mxu0 %v1981
      %2032 = vmatpush.msra.mxu0 %v1980
      %2033 = vmatpush.msra.mxu0 %v1979
      %2034 = vmatpush.msra.mxu0 %v1978
      %2035 = vmatpush.msra.mxu0 %v1977
      %2036 = vmatpush.msra.mxu0 %v1976
      %2037 = vmatpush.msra.mxu0 %v1975
      %2038 = vmatpush.msra.mxu0 %v1974
      %2039 = vmatpush.msra.mxu0 %v1973
      %2040 = vmatpush.msra.mxu0 %v1972
      %2041 = vmatmul.f32.gmra.mxu0 %v1907
      %v2042 = vpop.f32.mrf.mxu0
      %v2043 = vadd.f32 %v2023, %v2042
      %2044 = vmatmul.f32.gmra.mxu0 %v1908
      %v2045 = vpop.f32.mrf.mxu0
      %v2046 = vadd.f32 %v2023, %v2045
      %2047 = vmatmul.f32.gmra.mxu0 %v1909
      %v2048 = vpop.f32.mrf.mxu0
      %v2049 = vadd.f32 %v2023, %v2048
      %2050 = vmatmul.f32.gmra.mxu0 %v1910
      %v2051 = vpop.f32.mrf.mxu0
      %v2052 = vadd.f32 %v2023, %v2051
      %2053 = vmatmul.f32.gmra.mxu0 %v1911
      %v2054 = vpop.f32.mrf.mxu0
      %v2055 = vadd.f32 %v2023, %v2054
      %2056 = vmatmul.f32.gmra.mxu0 %v1912
      %v2057 = vpop.f32.mrf.mxu0
      %v2058 = vadd.f32 %v2023, %v2057
      %2059 = vmatmul.f32.gmra.mxu0 %v1913
      %v2060 = vpop.f32.mrf.mxu0
      %v2061 = vadd.f32 %v2023, %v2060
      %2062 = vmatmul.f32.gmra.mxu0 %v1914
      %v2063 = vpop.f32.mrf.mxu0
      %v2064 = vadd.f32 %v2023, %v2063
      %2065 = vmatmul.f32.gmra.mxu0 %v1915
      %v2066 = vpop.f32.mrf.mxu0
      %v2067 = vadd.f32 %v2023, %v2066
      %2068 = vmatmul.f32.gmra.mxu0 %v1916
      %v2069 = vpop.f32.mrf.mxu0
      %v2070 = vadd.f32 %v2023, %v2069
      %2071 = vmatmul.f32.gmra.mxu0 %v1917
      %v2072 = vpop.f32.mrf.mxu0
      %v2073 = vadd.f32 %v2023, %v2072
      %2074 = vmatmul.f32.gmra.mxu0 %v1918
      %v2075 = vpop.f32.mrf.mxu0
      %v2076 = vadd.f32 %v2023, %v2075
      %2077 = vmatmul.f32.gmra.mxu0 %v1919
      %v2078 = vpop.f32.mrf.mxu0
      %v2079 = vadd.f32 %v2023, %v2078
      %2080 = vmatmul.f32.gmra.mxu0 %v1920
      %v2081 = vpop.f32.mrf.mxu0
      %v2082 = vadd.f32 %v2023, %v2081
      %2083 = vmatmul.f32.gmra.mxu0 %v1921
      %v2084 = vpop.f32.mrf.mxu0
      %v2085 = vadd.f32 %v2023, %v2084
      %2086 = vmatmul.f32.gmra.mxu0 %v1922
      %v2087 = vpop.f32.mrf.mxu0
      %v2088 = vadd.f32 %v2023, %v2087
      %2089 = vdwg.mxu0
      %2090 = vmatpush.msra.mxu0 %v2003
      %2091 = vmatpush.msra.mxu0 %v2002
      %2092 = vmatpush.msra.mxu0 %v2001
      %2093 = vmatpush.msra.mxu0 %v2000
      %2094 = vmatpush.msra.mxu0 %v1999
      %2095 = vmatpush.msra.mxu0 %v1998
      %2096 = vmatpush.msra.mxu0 %v1997
      %2097 = vmatpush.msra.mxu0 %v1996
      %2098 = vmatpush.msra.mxu0 %v1995
      %2099 = vmatpush.msra.mxu0 %v1994
      %2100 = vmatpush.msra.mxu0 %v1993
      %2101 = vmatpush.msra.mxu0 %v1992
      %2102 = vmatpush.msra.mxu0 %v1991
      %2103 = vmatpush.msra.mxu0 %v1990
      %2104 = vmatpush.msra.mxu0 %v1989
      %2105 = vmatpush.msra.mxu0 %v1988
      %2106 = vmatmul.f32.gmra.mxu0 %v1859
      %v2107 = vpop.f32.mrf.mxu0
      %v2108 = vadd.f32 %v2043, %v2107
      %2109 = vmatmul.f32.gmra.mxu0 %v1860
      %v2110 = vpop.f32.mrf.mxu0
      %v2111 = vadd.f32 %v2046, %v2110
      %2112 = vmatmul.f32.gmra.mxu0 %v1861
      %v2113 = vpop.f32.mrf.mxu0
      %v2114 = vadd.f32 %v2049, %v2113
      %2115 = vmatmul.f32.gmra.mxu0 %v1862
      %v2116 = vpop.f32.mrf.mxu0
      %v2117 = vadd.f32 %v2052, %v2116
      %2118 = vmatmul.f32.gmra.mxu0 %v1863
      %v2119 = vpop.f32.mrf.mxu0
      %v2120 = vadd.f32 %v2055, %v2119
      %2121 = vmatmul.f32.gmra.mxu0 %v1864
      %v2122 = vpop.f32.mrf.mxu0
      %v2123 = vadd.f32 %v2058, %v2122
      %2124 = vmatmul.f32.gmra.mxu0 %v1865
      %v2125 = vpop.f32.mrf.mxu0
      %v2126 = vadd.f32 %v2061, %v2125
      %2127 = vmatmul.f32.gmra.mxu0 %v1866
      %v2128 = vpop.f32.mrf.mxu0
      %v2129 = vadd.f32 %v2064, %v2128
      %2130 = vmatmul.f32.gmra.mxu0 %v1867
      %v2131 = vpop.f32.mrf.mxu0
      %v2132 = vadd.f32 %v2067, %v2131
      %2133 = vmatmul.f32.gmra.mxu0 %v1868
      %v2134 = vpop.f32.mrf.mxu0
      %v2135 = vadd.f32 %v2070, %v2134
      %2136 = vmatmul.f32.gmra.mxu0 %v1869
      %v2137 = vpop.f32.mrf.mxu0
      %v2138 = vadd.f32 %v2073, %v2137
      %2139 = vmatmul.f32.gmra.mxu0 %v1870
      %v2140 = vpop.f32.mrf.mxu0
      %v2141 = vadd.f32 %v2076, %v2140
      %2142 = vmatmul.f32.gmra.mxu0 %v1871
      %v2143 = vpop.f32.mrf.mxu0
      %v2144 = vadd.f32 %v2079, %v2143
      %2145 = vmatmul.f32.gmra.mxu0 %v1872
      %v2146 = vpop.f32.mrf.mxu0
      %v2147 = vadd.f32 %v2082, %v2146
      %2148 = vmatmul.f32.gmra.mxu0 %v1873
      %v2149 = vpop.f32.mrf.mxu0
      %v2150 = vadd.f32 %v2085, %v2149
      %2151 = vmatmul.f32.gmra.mxu0 %v1874
      %v2152 = vpop.f32.mrf.mxu0
      %v2153 = vadd.f32 %v2088, %v2152
      %2154 = vdwg.mxu0
      %2155 = vmatpush.msra.mxu0 %v2019
      %2156 = vmatpush.msra.mxu0 %v2018
      %2157 = vmatpush.msra.mxu0 %v2017
      %2158 = vmatpush.msra.mxu0 %v2016
      %2159 = vmatpush.msra.mxu0 %v2015
      %2160 = vmatpush.msra.mxu0 %v2014
      %2161 = vmatpush.msra.mxu0 %v2013
      %2162 = vmatpush.msra.mxu0 %v2012
      %2163 = vmatpush.msra.mxu0 %v2011
      %2164 = vmatpush.msra.mxu0 %v2010
      %2165 = vmatpush.msra.mxu0 %v2009
      %2166 = vmatpush.msra.mxu0 %v2008
      %2167 = vmatpush.msra.mxu0 %v2007
      %2168 = vmatpush.msra.mxu0 %v2006
      %2169 = vmatpush.msra.mxu0 %v2005
      %2170 = vmatpush.msra.mxu0 %v2004
      %2171 = vmatmul.f32.gmra.mxu0 %v1955
      %v2172 = vpop.f32.mrf.mxu0
      %v2173 = vadd.f32 %v2108, %v2172
      %2174 = vmatmul.f32.gmra.mxu0 %v1956
      %v2175 = vpop.f32.mrf.mxu0
      %v2176 = vadd.f32 %v2111, %v2175
      %2177 = vmatmul.f32.gmra.mxu0 %v1957
      %v2178 = vpop.f32.mrf.mxu0
      %v2179 = vadd.f32 %v2114, %v2178
      %2180 = vmatmul.f32.gmra.mxu0 %v1958
      %v2181 = vpop.f32.mrf.mxu0
      %v2182 = vadd.f32 %v2117, %v2181
      %2183 = vmatmul.f32.gmra.mxu0 %v1959
      %v2184 = vpop.f32.mrf.mxu0
      %v2185 = vadd.f32 %v2120, %v2184
      %2186 = vmatmul.f32.gmra.mxu0 %v1960
      %v2187 = vpop.f32.mrf.mxu0
      %v2188 = vadd.f32 %v2123, %v2187
      %2189 = vmatmul.f32.gmra.mxu0 %v1961
      %v2190 = vpop.f32.mrf.mxu0
      %v2191 = vadd.f32 %v2126, %v2190
      %2192 = vmatmul.f32.gmra.mxu0 %v1962
      %v2193 = vpop.f32.mrf.mxu0
      %v2194 = vadd.f32 %v2129, %v2193
      %2195 = vmatmul.f32.gmra.mxu0 %v1963
      %v2196 = vpop.f32.mrf.mxu0
      %v2197 = vadd.f32 %v2132, %v2196
      %2198 = vmatmul.f32.gmra.mxu0 %v1964
      %v2199 = vpop.f32.mrf.mxu0
      %v2200 = vadd.f32 %v2135, %v2199
      %2201 = vmatmul.f32.gmra.mxu0 %v1965
      %v2202 = vpop.f32.mrf.mxu0
      %v2203 = vadd.f32 %v2138, %v2202
      %2204 = vmatmul.f32.gmra.mxu0 %v1966
      %v2205 = vpop.f32.mrf.mxu0
      %v2206 = vadd.f32 %v2141, %v2205
      %2207 = vmatmul.f32.gmra.mxu0 %v1967
      %v2208 = vpop.f32.mrf.mxu0
      %v2209 = vadd.f32 %v2144, %v2208
      %2210 = vmatmul.f32.gmra.mxu0 %v1968
      %v2211 = vpop.f32.mrf.mxu0
      %v2212 = vadd.f32 %v2147, %v2211
      %2213 = vmatmul.f32.gmra.mxu0 %v1969
      %v2214 = vpop.f32.mrf.mxu0
      %v2215 = vadd.f32 %v2150, %v2214
      %2216 = vmatmul.f32.gmra.mxu0 %v1970
      %v2217 = vpop.f32.mrf.mxu0
      %v2218 = vadd.f32 %v2153, %v2217
      %2219 = vdwg.mxu0
      %v2220 = vmax.f32 %v2173, 0.0
      %v2221 = vmax.f32 %v2176, 0.0
      %v2222 = vmax.f32 %v2179, 0.0
      %v2223 = vmax.f32 %v2182, 0.0
      %v2224 = vmax.f32 %v2185, 0.0
      %v2225 = vmax.f32 %v2188, 0.0
      %v2226 = vmax.f32 %v2191, 0.0
      %v2227 = vmax.f32 %v2194, 0.0
      %v2228 = vmax.f32 %v2197, 0.0
      %v2229 = vmax.f32 %v2200, 0.0
      %v2230 = vmax.f32 %v2203, 0.0
      %v2231 = vmax.f32 %v2206, 0.0
      %v2232 = vmax.f32 %v2209, 0.0
      %v2233 = vmax.f32 %v2212, 0.0
      %v2234 = vmax.f32 %v2215, 0.0
      %v2235 = vmax.f32 %v2218, 0.0
      %v2236 = vrot.slane %v2220, 7
      %v2237 = vrot.slane %v2221, 7
      %v2238 = vrot.slane %v2222, 7
      %v2239 = vrot.slane %v2223, 7
      %v2240 = vrot.slane %v2224, 7
      %v2241 = vrot.slane %v2225, 7
      %v2242 = vrot.slane %v2226, 7
      %v2243 = vrot.slane %v2227, 7
      %v2244 = vrot.slane %v2228, 7
      %v2245 = vrot.slane %v2229, 7
      %v2246 = vrot.slane %v2230, 7
      %v2247 = vrot.slane %v2231, 7
      %v2248 = vrot.slane %v2232, 7
      %v2249 = vrot.slane %v2233, 7
      %v2250 = vrot.slane %v2234, 7
      %v2251 = vrot.slane %v2235, 7
      %v2252 = vsel %vm447, %v2250, %v2251
      %v2253 = vsel %vm447, %v2249, %v2250
      %v2254 = vsel %vm447, %v2248, %v2249
      %v2255 = vsel %vm447, %v2247, %v2248
      %v2256 = vsel %vm447, %v2246, %v2247
      %v2257 = vsel %vm447, %v2245, %v2246
      %v2258 = vsel %vm447, %v2244, %v2245
      %v2259 = vsel %vm447, %v2243, %v2244
      %v2260 = vsel %vm447, %v2242, %v2243
      %v2261 = vsel %vm447, %v2241, %v2242
      %v2262 = vsel %vm447, %v2240, %v2241
      %v2263 = vsel %vm447, %v2239, %v2240
      %v2264 = vsel %vm447, %v2238, %v2239
      %v2265 = vsel %vm447, %v2237, %v2238
      %v2266 = vsel %vm447, %v2236, %v2237
      %v2267 = vsel %vm447, %v2251, %v2236
      %v2268 = vsel %vm383, 0.0, %v2267
      %v2269 = vsel %vm384, 0.0, %v2266
      %v2270 = vsel %vm385, 0.0, %v2265
      %v2271 = vsel %vm386, 0.0, %v2264
      %v2272 = vsel %vm387, 0.0, %v2263
      %v2273 = vsel %vm388, 0.0, %v2262
      %v2274 = vsel %vm389, 0.0, %v2261
      %v2275 = vsel %vm390, 0.0, %v2260
      %v2276 = vsel %vm391, 0.0, %v2259
      %v2277 = vsel %vm392, 0.0, %v2258
      %v2278 = vsel %vm393, 0.0, %v2257
      %v2279 = vsel %vm394, 0.0, %v2256
      %v2280 = vsel %vm395, 0.0, %v2255
      %v2281 = vsel %vm396, 0.0, %v2254
      %v2282 = vsel %vm397, 0.0, %v2253
      %v2283 = vsel %vm398, 0.0, %v2252
      %v2284 = vrot.slane %v2220, 1
      %v2285 = vrot.slane %v2221, 1
      %v2286 = vrot.slane %v2222, 1
      %v2287 = vrot.slane %v2223, 1
      %v2288 = vrot.slane %v2224, 1
      %v2289 = vrot.slane %v2225, 1
      %v2290 = vrot.slane %v2226, 1
      %v2291 = vrot.slane %v2227, 1
      %v2292 = vrot.slane %v2228, 1
      %v2293 = vrot.slane %v2229, 1
      %v2294 = vrot.slane %v2230, 1
      %v2295 = vrot.slane %v2231, 1
      %v2296 = vrot.slane %v2232, 1
      %v2297 = vrot.slane %v2233, 1
      %v2298 = vrot.slane %v2234, 1
      %v2299 = vrot.slane %v2235, 1
      %v2300 = vsel %vm496, %v2298, %v2299
      %v2301 = vsel %vm496, %v2297, %v2298
      %v2302 = vsel %vm496, %v2296, %v2297
      %v2303 = vsel %vm496, %v2295, %v2296
      %v2304 = vsel %vm496, %v2294, %v2295
      %v2305 = vsel %vm496, %v2293, %v2294
      %v2306 = vsel %vm496, %v2292, %v2293
      %v2307 = vsel %vm496, %v2291, %v2292
      %v2308 = vsel %vm496, %v2290, %v2291
      %v2309 = vsel %vm496, %v2289, %v2290
      %v2310 = vsel %vm496, %v2288, %v2289
      %v2311 = vsel %vm496, %v2287, %v2288
      %v2312 = vsel %vm496, %v2286, %v2287
      %v2313 = vsel %vm496, %v2285, %v2286
      %v2314 = vsel %vm496, %v2284, %v2285
      %v2315 = vsel %vm496, %v2299, %v2284
      %v2316 = vsel %vm399, 0.0, %v2314
      %v2317 = vsel %vm400, 0.0, %v2313
      %v2318 = vsel %vm401, 0.0, %v2312
      %v2319 = vsel %vm402, 0.0, %v2311
      %v2320 = vsel %vm403, 0.0, %v2310
      %v2321 = vsel %vm404, 0.0, %v2309
      %v2322 = vsel %vm405, 0.0, %v2308
      %v2323 = vsel %vm406, 0.0, %v2307
      %v2324 = vsel %vm407, 0.0, %v2306
      %v2325 = vsel %vm408, 0.0, %v2305
      %v2326 = vsel %vm409, 0.0, %v2304
      %v2327 = vsel %vm410, 0.0, %v2303
      %v2328 = vsel %vm411, 0.0, %v2302
      %v2329 = vsel %vm412, 0.0, %v2301
      %v2330 = vsel %vm413, 0.0, %v2300
      %v2331 = vsel %vm414, 0.0, %v2315
      %s2332 = scalar_lea.vmem %s1, 1920
      %v2333 = vld [vmem:[%s2332] sm:$0xff]
      %v2334 = vld [vmem:[%s2332 + $0x8] sm:$0xff]
      %v2335 = vld [vmem:[%s2332 + $0x10] sm:$0xff]
      %v2336 = vld [vmem:[%s2332 + $0x18] sm:$0xff]
      %v2337 = vld [vmem:[%s2332 + $0x20] sm:$0xff]
      %v2338 = vld [vmem:[%s2332 + $0x28] sm:$0xff]
      %v2339 = vld [vmem:[%s2332 + $0x30] sm:$0xff]
      %v2340 = vld [vmem:[%s2332 + $0x38] sm:$0xff]
      %v2341 = vld [vmem:[%s2332 + $0x40] sm:$0xff]
      %v2342 = vld [vmem:[%s2332 + $0x48] sm:$0xff]
      %v2343 = vld [vmem:[%s2332 + $0x50] sm:$0xff]
      %v2344 = vld [vmem:[%s2332 + $0x58] sm:$0xff]
      %v2345 = vld [vmem:[%s2332 + $0x60] sm:$0xff]
      %v2346 = vld [vmem:[%s2332 + $0x68] sm:$0xff]
      %v2347 = vld [vmem:[%s2332 + $0x70] sm:$0xff]
      %v2348 = vld [vmem:[%s2332 + $0x78] sm:$0xff]
      %v2349 = vld [vmem:[%s2332 + $0x80] sm:$0xff]
      %v2350 = vld [vmem:[%s2332 + $0x88] sm:$0xff]
      %v2351 = vld [vmem:[%s2332 + $0x90] sm:$0xff]
      %v2352 = vld [vmem:[%s2332 + $0x98] sm:$0xff]
      %v2353 = vld [vmem:[%s2332 + $0xa0] sm:$0xff]
      %v2354 = vld [vmem:[%s2332 + $0xa8] sm:$0xff]
      %v2355 = vld [vmem:[%s2332 + $0xb0] sm:$0xff]
      %v2356 = vld [vmem:[%s2332 + $0xb8] sm:$0xff]
      %v2357 = vld [vmem:[%s2332 + $0xc0] sm:$0xff]
      %v2358 = vld [vmem:[%s2332 + $0xc8] sm:$0xff]
      %v2359 = vld [vmem:[%s2332 + $0xd0] sm:$0xff]
      %v2360 = vld [vmem:[%s2332 + $0xd8] sm:$0xff]
      %v2361 = vld [vmem:[%s2332 + $0xe0] sm:$0xff]
      %v2362 = vld [vmem:[%s2332 + $0xe8] sm:$0xff]
      %v2363 = vld [vmem:[%s2332 + $0xf0] sm:$0xff]
      %v2364 = vld [vmem:[%s2332 + $0xf8] sm:$0xff]
      %v2365 = vld [vmem:[%s2332 + $0x100] sm:$0xff]
      %v2366 = vld [vmem:[%s2332 + $0x108] sm:$0xff]
      %v2367 = vld [vmem:[%s2332 + $0x110] sm:$0xff]
      %v2368 = vld [vmem:[%s2332 + $0x118] sm:$0xff]
      %v2369 = vld [vmem:[%s2332 + $0x120] sm:$0xff]
      %v2370 = vld [vmem:[%s2332 + $0x128] sm:$0xff]
      %v2371 = vld [vmem:[%s2332 + $0x130] sm:$0xff]
      %v2372 = vld [vmem:[%s2332 + $0x138] sm:$0xff]
      %v2373 = vld [vmem:[%s2332 + $0x140] sm:$0xff]
      %v2374 = vld [vmem:[%s2332 + $0x148] sm:$0xff]
      %v2375 = vld [vmem:[%s2332 + $0x150] sm:$0xff]
      %v2376 = vld [vmem:[%s2332 + $0x158] sm:$0xff]
      %v2377 = vld [vmem:[%s2332 + $0x160] sm:$0xff]
      %v2378 = vld [vmem:[%s2332 + $0x168] sm:$0xff]
      %v2379 = vld [vmem:[%s2332 + $0x170] sm:$0xff]
      %v2380 = vld [vmem:[%s2332 + $0x178] sm:$0xff]
      %s2381 = scalar_lea.vmem %s2, 5
      %v2382 = vld [vmem:[%s2381] sm:$0x1]
      %v2384 = vperm.slane %v2382, 0
      %2386 = vmatpush.msra.mxu0 %v2348
      %2387 = vmatpush.msra.mxu0 %v2347
      %2388 = vmatpush.msra.mxu0 %v2346
      %2389 = vmatpush.msra.mxu0 %v2345
      %2390 = vmatpush.msra.mxu0 %v2344
      %2391 = vmatpush.msra.mxu0 %v2343
      %2392 = vmatpush.msra.mxu0 %v2342
      %2393 = vmatpush.msra.mxu0 %v2341
      %2394 = vmatpush.msra.mxu0 %v2340
      %2395 = vmatpush.msra.mxu0 %v2339
      %2396 = vmatpush.msra.mxu0 %v2338
      %2397 = vmatpush.msra.mxu0 %v2337
      %2398 = vmatpush.msra.mxu0 %v2336
      %2399 = vmatpush.msra.mxu0 %v2335
      %2400 = vmatpush.msra.mxu0 %v2334
      %2401 = vmatpush.msra.mxu0 %v2333
      %2402 = vmatmul.f32.gmra.mxu0 %v2268
      %v2403 = vpop.f32.mrf.mxu0
      %v2404 = vadd.f32 %v2384, %v2403
      %2405 = vmatmul.f32.gmra.mxu0 %v2269
      %v2406 = vpop.f32.mrf.mxu0
      %v2407 = vadd.f32 %v2384, %v2406
      %2408 = vmatmul.f32.gmra.mxu0 %v2270
      %v2409 = vpop.f32.mrf.mxu0
      %v2410 = vadd.f32 %v2384, %v2409
      %2411 = vmatmul.f32.gmra.mxu0 %v2271
      %v2412 = vpop.f32.mrf.mxu0
      %v2413 = vadd.f32 %v2384, %v2412
      %2414 = vmatmul.f32.gmra.mxu0 %v2272
      %v2415 = vpop.f32.mrf.mxu0
      %v2416 = vadd.f32 %v2384, %v2415
      %2417 = vmatmul.f32.gmra.mxu0 %v2273
      %v2418 = vpop.f32.mrf.mxu0
      %v2419 = vadd.f32 %v2384, %v2418
      %2420 = vmatmul.f32.gmra.mxu0 %v2274
      %v2421 = vpop.f32.mrf.mxu0
      %v2422 = vadd.f32 %v2384, %v2421
      %2423 = vmatmul.f32.gmra.mxu0 %v2275
      %v2424 = vpop.f32.mrf.mxu0
      %v2425 = vadd.f32 %v2384, %v2424
      %2426 = vmatmul.f32.gmra.mxu0 %v2276
      %v2427 = vpop.f32.mrf.mxu0
      %v2428 = vadd.f32 %v2384, %v2427
      %2429 = vmatmul.f32.gmra.mxu0 %v2277
      %v2430 = vpop.f32.mrf.mxu0
      %v2431 = vadd.f32 %v2384, %v2430
      %2432 = vmatmul.f32.gmra.mxu0 %v2278
      %v2433 = vpop.f32.mrf.mxu0
      %v2434 = vadd.f32 %v2384, %v2433
      %2435 = vmatmul.f32.gmra.mxu0 %v2279
      %v2436 = vpop.f32.mrf.mxu0
      %v2437 = vadd.f32 %v2384, %v2436
      %2438 = vmatmul.f32.gmra.mxu0 %v2280
      %v2439 = vpop.f32.mrf.mxu0
      %v2440 = vadd.f32 %v2384, %v2439
      %2441 = vmatmul.f32.gmra.mxu0 %v2281
      %v2442 = vpop.f32.mrf.mxu0
      %v2443 = vadd.f32 %v2384, %v2442
      %2444 = vmatmul.f32.gmra.mxu0 %v2282
      %v2445 = vpop.f32.mrf.mxu0
      %v2446 = vadd.f32 %v2384, %v2445
      %2447 = vmatmul.f32.gmra.mxu0 %v2283
      %v2448 = vpop.f32.mrf.mxu0
      %v2449 = vadd.f32 %v2384, %v2448
      %2450 = vdwg.mxu0
      %2451 = vmatpush.msra.mxu0 %v2364
      %2452 = vmatpush.msra.mxu0 %v2363
      %2453 = vmatpush.msra.mxu0 %v2362
      %2454 = vmatpush.msra.mxu0 %v2361
      %2455 = vmatpush.msra.mxu0 %v2360
      %2456 = vmatpush.msra.mxu0 %v2359
      %2457 = vmatpush.msra.mxu0 %v2358
      %2458 = vmatpush.msra.mxu0 %v2357
      %2459 = vmatpush.msra.mxu0 %v2356
      %2460 = vmatpush.msra.mxu0 %v2355
      %2461 = vmatpush.msra.mxu0 %v2354
      %2462 = vmatpush.msra.mxu0 %v2353
      %2463 = vmatpush.msra.mxu0 %v2352
      %2464 = vmatpush.msra.mxu0 %v2351
      %2465 = vmatpush.msra.mxu0 %v2350
      %2466 = vmatpush.msra.mxu0 %v2349
      %2467 = vmatmul.f32.gmra.mxu0 %v2220
      %v2468 = vpop.f32.mrf.mxu0
      %v2469 = vadd.f32 %v2404, %v2468
      %2470 = vmatmul.f32.gmra.mxu0 %v2221
      %v2471 = vpop.f32.mrf.mxu0
      %v2472 = vadd.f32 %v2407, %v2471
      %2473 = vmatmul.f32.gmra.mxu0 %v2222
      %v2474 = vpop.f32.mrf.mxu0
      %v2475 = vadd.f32 %v2410, %v2474
      %2476 = vmatmul.f32.gmra.mxu0 %v2223
      %v2477 = vpop.f32.mrf.mxu0
      %v2478 = vadd.f32 %v2413, %v2477
      %2479 = vmatmul.f32.gmra.mxu0 %v2224
      %v2480 = vpop.f32.mrf.mxu0
      %v2481 = vadd.f32 %v2416, %v2480
      %2482 = vmatmul.f32.gmra.mxu0 %v2225
      %v2483 = vpop.f32.mrf.mxu0
      %v2484 = vadd.f32 %v2419, %v2483
      %2485 = vmatmul.f32.gmra.mxu0 %v2226
      %v2486 = vpop.f32.mrf.mxu0
      %v2487 = vadd.f32 %v2422, %v2486
      %2488 = vmatmul.f32.gmra.mxu0 %v2227
      %v2489 = vpop.f32.mrf.mxu0
      %v2490 = vadd.f32 %v2425, %v2489
      %2491 = vmatmul.f32.gmra.mxu0 %v2228
      %v2492 = vpop.f32.mrf.mxu0
      %v2493 = vadd.f32 %v2428, %v2492
      %2494 = vmatmul.f32.gmra.mxu0 %v2229
      %v2495 = vpop.f32.mrf.mxu0
      %v2496 = vadd.f32 %v2431, %v2495
      %2497 = vmatmul.f32.gmra.mxu0 %v2230
      %v2498 = vpop.f32.mrf.mxu0
      %v2499 = vadd.f32 %v2434, %v2498
      %2500 = vmatmul.f32.gmra.mxu0 %v2231
      %v2501 = vpop.f32.mrf.mxu0
      %v2502 = vadd.f32 %v2437, %v2501
      %2503 = vmatmul.f32.gmra.mxu0 %v2232
      %v2504 = vpop.f32.mrf.mxu0
      %v2505 = vadd.f32 %v2440, %v2504
      %2506 = vmatmul.f32.gmra.mxu0 %v2233
      %v2507 = vpop.f32.mrf.mxu0
      %v2508 = vadd.f32 %v2443, %v2507
      %2509 = vmatmul.f32.gmra.mxu0 %v2234
      %v2510 = vpop.f32.mrf.mxu0
      %v2511 = vadd.f32 %v2446, %v2510
      %2512 = vmatmul.f32.gmra.mxu0 %v2235
      %v2513 = vpop.f32.mrf.mxu0
      %v2514 = vadd.f32 %v2449, %v2513
      %2515 = vdwg.mxu0
      %2516 = vmatpush.msra.mxu0 %v2380
      %2517 = vmatpush.msra.mxu0 %v2379
      %2518 = vmatpush.msra.mxu0 %v2378
      %2519 = vmatpush.msra.mxu0 %v2377
      %2520 = vmatpush.msra.mxu0 %v2376
      %2521 = vmatpush.msra.mxu0 %v2375
      %2522 = vmatpush.msra.mxu0 %v2374
      %2523 = vmatpush.msra.mxu0 %v2373
      %2524 = vmatpush.msra.mxu0 %v2372
      %2525 = vmatpush.msra.mxu0 %v2371
      %2526 = vmatpush.msra.mxu0 %v2370
      %2527 = vmatpush.msra.mxu0 %v2369
      %2528 = vmatpush.msra.mxu0 %v2368
      %2529 = vmatpush.msra.mxu0 %v2367
      %2530 = vmatpush.msra.mxu0 %v2366
      %2531 = vmatpush.msra.mxu0 %v2365
      %2532 = vmatmul.f32.gmra.mxu0 %v2316
      %v2533 = vpop.f32.mrf.mxu0
      %v2534 = vadd.f32 %v2469, %v2533
      %2535 = vmatmul.f32.gmra.mxu0 %v2317
      %v2536 = vpop.f32.mrf.mxu0
      %v2537 = vadd.f32 %v2472, %v2536
      %2538 = vmatmul.f32.gmra.mxu0 %v2318
      %v2539 = vpop.f32.mrf.mxu0
      %v2540 = vadd.f32 %v2475, %v2539
      %2541 = vmatmul.f32.gmra.mxu0 %v2319
      %v2542 = vpop.f32.mrf.mxu0
      %v2543 = vadd.f32 %v2478, %v2542
      %2544 = vmatmul.f32.gmra.mxu0 %v2320
      %v2545 = vpop.f32.mrf.mxu0
      %v2546 = vadd.f32 %v2481, %v2545
      %2547 = vmatmul.f32.gmra.mxu0 %v2321
      %v2548 = vpop.f32.mrf.mxu0
      %v2549 = vadd.f32 %v2484, %v2548
      %2550 = vmatmul.f32.gmra.mxu0 %v2322
      %v2551 = vpop.f32.mrf.mxu0
      %v2552 = vadd.f32 %v2487, %v2551
      %2553 = vmatmul.f32.gmra.mxu0 %v2323
      %v2554 = vpop.f32.mrf.mxu0
      %v2555 = vadd.f32 %v2490, %v2554
      %2556 = vmatmul.f32.gmra.mxu0 %v2324
      %v2557 = vpop.f32.mrf.mxu0
      %v2558 = vadd.f32 %v2493, %v2557
      %2559 = vmatmul.f32.gmra.mxu0 %v2325
      %v2560 = vpop.f32.mrf.mxu0
      %v2561 = vadd.f32 %v2496, %v2560
      %2562 = vmatmul.f32.gmra.mxu0 %v2326
      %v2563 = vpop.f32.mrf.mxu0
      %v2564 = vadd.f32 %v2499, %v2563
      %2565 = vmatmul.f32.gmra.mxu0 %v2327
      %v2566 = vpop.f32.mrf.mxu0
      %v2567 = vadd.f32 %v2502, %v2566
      %2568 = vmatmul.f32.gmra.mxu0 %v2328
      %v2569 = vpop.f32.mrf.mxu0
      %v2570 = vadd.f32 %v2505, %v2569
      %2571 = vmatmul.f32.gmra.mxu0 %v2329
      %v2572 = vpop.f32.mrf.mxu0
      %v2573 = vadd.f32 %v2508, %v2572
      %2574 = vmatmul.f32.gmra.mxu0 %v2330
      %v2575 = vpop.f32.mrf.mxu0
      %v2576 = vadd.f32 %v2511, %v2575
      %2577 = vmatmul.f32.gmra.mxu0 %v2331
      %v2578 = vpop.f32.mrf.mxu0
      %v2579 = vadd.f32 %v2514, %v2578
      %2580 = vdwg.mxu0
      %v2581 = vadd.f32 %v1859, %v2534
      %v2582 = vadd.f32 %v1860, %v2537
      %v2583 = vadd.f32 %v1861, %v2540
      %v2584 = vadd.f32 %v1862, %v2543
      %v2585 = vadd.f32 %v1863, %v2546
      %v2586 = vadd.f32 %v1864, %v2549
      %v2587 = vadd.f32 %v1865, %v2552
      %v2588 = vadd.f32 %v1866, %v2555
      %v2589 = vadd.f32 %v1867, %v2558
      %v2590 = vadd.f32 %v1868, %v2561
      %v2591 = vadd.f32 %v1869, %v2564
      %v2592 = vadd.f32 %v1870, %v2567
      %v2593 = vadd.f32 %v1871, %v2570
      %v2594 = vadd.f32 %v1872, %v2573
      %v2595 = vadd.f32 %v1873, %v2576
      %v2596 = vadd.f32 %v1874, %v2579
      %v2597 = vadd.f32 %v415, %v2581
      %v2598 = vadd.f32 %v416, %v2582
      %v2599 = vadd.f32 %v417, %v2583
      %v2600 = vadd.f32 %v418, %v2584
      %v2601 = vadd.f32 %v419, %v2585
      %v2602 = vadd.f32 %v420, %v2586
      %v2603 = vadd.f32 %v421, %v2587
      %v2604 = vadd.f32 %v422, %v2588
      %v2605 = vadd.f32 %v423, %v2589
      %v2606 = vadd.f32 %v424, %v2590
      %v2607 = vadd.f32 %v425, %v2591
      %v2608 = vadd.f32 %v426, %v2592
      %v2609 = vadd.f32 %v427, %v2593
      %v2610 = vadd.f32 %v428, %v2594
      %v2611 = vadd.f32 %v429, %v2595
      %v2612 = vadd.f32 %v430, %v2596
      %2613 = vst [vmem:[%s172] sm:$0xff] %v2597
      %2614 = vst [vmem:[%s172 + $0x8] sm:$0xff] %v2598
      %2615 = vst [vmem:[%s172 + $0x10] sm:$0xff] %v2599
      %2616 = vst [vmem:[%s172 + $0x18] sm:$0xff] %v2600
      %2617 = vst [vmem:[%s172 + $0x20] sm:$0xff] %v2601
      %2618 = vst [vmem:[%s172 + $0x28] sm:$0xff] %v2602
      %2619 = vst [vmem:[%s172 + $0x30] sm:$0xff] %v2603
      %2620 = vst [vmem:[%s172 + $0x38] sm:$0xff] %v2604
      %2621 = vst [vmem:[%s172 + $0x40] sm:$0xff] %v2605
      %2622 = vst [vmem:[%s172 + $0x48] sm:$0xff] %v2606
      %2623 = vst [vmem:[%s172 + $0x50] sm:$0xff] %v2607
      %2624 = vst [vmem:[%s172 + $0x58] sm:$0xff] %v2608
      %2625 = vst [vmem:[%s172 + $0x60] sm:$0xff] %v2609
      %2626 = vst [vmem:[%s172 + $0x68] sm:$0xff] %v2610
      %2627 = vst [vmem:[%s172 + $0x70] sm:$0xff] %v2611
      %2628 = vst [vmem:[%s172 + $0x78] sm:$0xff] %v2612
      %s2629 = smul.u32 16, %s14
      %p2630 = scmp.lt.s32.totalorder %s2629, 31
      %s2631 = scalar_select %p2630, %s2629, 31
      %s2632 = smul.addr %s2631, 8
      %s2633 = scalar_lea.vmem %s3, %s2632
      // Predicated region
      $region33: #{lk_resblocks_forward.1} parent=31 // pred_check
        %p2634 = pneg %p100
      $region34: #{lk_resblocks_forward.1} parent=31 // pred_check_branch
        %2636 = sbr.rel (%p2634) target = $region36
      $region35: #{lk_resblocks_forward.1} parent=31 // pred_region
        %s2637 = smul.u32 16, %s14
      $region36: #{lk_resblocks_forward.1} parent=31 // pred_fallthru
        _
    $region32: #{lk_resblocks_forward.1} parent=5 // pred_fallthru
      _
    %p2638 = scmp.le.s32.totalorder 2, %s9
    // Predicated region
    $region37: #{lk_resblocks_forward.1} parent=5 // pred_check
      %p2639 = pneg %p2638
    $region38: #{lk_resblocks_forward.1} parent=5 // pred_check_branch
      %2641 = sbr.rel (%p2639) target = $region40
    $region39: #{lk_resblocks_forward.1} parent=5 // pred_region
      %s2642 = ssub.s32 %s9, 2
      // Predicated region
      $region41: #{lk_resblocks_forward.1} parent=39 // pred_check
        %p2643 = pneg %p106
      $region42: #{lk_resblocks_forward.1} parent=39 // pred_check_branch
        %2645 = sbr.rel (%p2643) target = $region44
      $region43: #{lk_resblocks_forward.1} parent=39 // pred_region
        %s2646 = smul.u32 16, %s15
        %p2647 = scmp.lt.s32.totalorder %s2646, 31
        %s2648 = scalar_select %p2647, %s2646, 31
        %s2649 = smul.addr %s2648, 8
        %s2650 = scalar_lea.vmem %s3, %s2649
      $region44: #{lk_resblocks_forward.1} parent=39 // pred_fallthru
        _
    $region40: #{lk_resblocks_forward.1} parent=5 // pred_fallthru
      _
  $region6: #{lk_resblocks_forward.1} parent=0 // loop_footer
    %s13 = sadd.s32 1, %s9
  $region7: #{lk_resblocks_forward.1} parent=0 // loop_footer_branch
    %8 = sbr.rel target = $region3
  $region8: #{lk_resblocks_forward.1} parent=0 // loop_exit
    _

</llo_original>
